<compile_context>
chip_gen: v5e
topology: v5e:2x2
jax: 0.10.0
libtpu: 0.0.40
codegen_flags: <defaults>
</compile_context>

<pallas_src>
import jax
import jax.numpy as jnp
from jax.experimental import pallas as pl
from jax.experimental.pallas import tpu as pltpu

EPS = 1e-5
LANES = 128                      # channel padding target (TPU lane width)
TILE_H = 8                       # output rows per grid tile
VMEM_LIMIT = 32 * 1024 * 1024    # explicit scoped-VMEM budget (safe on v5e/v6e/v7x)


def _round_up(x, m):
    return ((x + m - 1) // m) * m


# ----------------------------- Pallas kernels --------------------------------
def conv3x3_stats_kernel(x_ref, xh_ref, w_ref, y_ref, st_ref):
    """One row-tile of a 3x3 'same' convolution + per-tile BN partial stats.

    x_ref  : (1, TH, Wp, CPin)  bf16  rows [i*TH, i*TH+TH) of the padded input
    xh_ref : (1, TH, Wp, CPin)  bf16  rows [(i+1)*TH, ...); only first 2 rows used (halo)
    w_ref  : (9*CPin, CPo)      bf16  packed 3x3 taps, zero-padded channels
    y_ref  : (1, TH, W, CPo)    f32   pre-BN conv output tile (lane-dense)
    st_ref : (1, 1, 8, CPo)     f32   row0 = sum, row1 = sum of squares
    """
    _, TH, Wp, CPin = x_ref.shape
    W = Wp - 2
    CPo = y_ref.shape[-1]

    x_mid = x_ref[0]                               # (TH,   Wp, CPin)
    x_halo = xh_ref[0][:2]                         # (2,    Wp, CPin)
    x = jnp.concatenate([x_mid, x_halo], axis=0)   # (TH+2, Wp, CPin)

    # im2col built once per tile -> single wide-K MXU matmul (K = 9*CPin),
    # bf16 operands, f32 accumulation.
    cols = [x[dy:dy + TH, dx:dx + W, :] for dy in range(3) for dx in range(3)]
    patches = jnp.concatenate(cols, axis=-1).reshape(TH * W, 9 * CPin)
    acc = jnp.dot(patches, w_ref[...], preferred_element_type=jnp.float32)

    y_ref[...] = acc.reshape(1, TH, W, CPo)

    # One-pass partial statistics (sum, sum-of-squares) while acc is resident.
    s1 = jnp.sum(acc, axis=0, keepdims=True)
    s2 = jnp.sum(acc * acc, axis=0, keepdims=True)
    st_ref[...] = jnp.concatenate(
        [s1, s2, jnp.zeros((6, CPo), jnp.float32)], axis=0)[None, None]


def bn_relu_kernel(y_ref, scale_ref, shift_ref, o_ref):
    """y*scale + shift, ReLU, lane-dense store (scale/shift fold mean/var/gamma/beta)."""
    y = y_ref[...]
    s = scale_ref[...].reshape(1, 1, 1, -1)
    b = shift_ref[...].reshape(1, 1, 1, -1)
    o_ref[...] = jnp.maximum(y * s + b, 0.0).astype(o_ref.dtype)


# ----------------------------- Pallas wrappers --------------------------------
def _conv3x3_tiled(xp, w_packed, th):
    """xp: (N, H+th, W+2, CPin) bf16 spatially padded input. Returns (conv, partial_stats)."""
    N, H_alloc, Wp, CPin = xp.shape
    H, W = H_alloc - th, Wp - 2
    CPo = w_packed.shape[-1]
    T = H // th

    return pl.pallas_call(
        conv3x3_stats_kernel,
        out_shape=(
            jax.ShapeDtypeStruct((N, H, W, CPo), jnp.float32),
            jax.ShapeDtypeStruct((N, T, 8, CPo), jnp.float32),
        ),
        grid_spec=pl.GridSpec(
            grid=(N, T),
            in_specs=[
                pl.BlockSpec((1, th, Wp, CPin), lambda n, i: (n, i, 0, 0)),
                # Halo rows come from the next row-block of the SAME array
                # (block index i+1) -- halo handled by the BlockSpec, not jnp glue.
                pl.BlockSpec((1, th, Wp, CPin), lambda n, i: (n, i + 1, 0, 0)),
                pl.BlockSpec((9 * CPin, CPo), lambda n, i: (0, 0)),
            ],
            out_specs=(
                pl.BlockSpec((1, th, W, CPo), lambda n, i: (n, i, 0, 0)),
                pl.BlockSpec((1, 1, 8, CPo), lambda n, i: (n, i, 0, 0)),
            ),
        ),
        compiler_params=pltpu.CompilerParams(
            dimension_semantics=("parallel", "parallel"),
            vmem_limit_bytes=VMEM_LIMIT),
    )(xp, xp, w_packed)


def _bn_relu_tiled(y, scale, shift, out_dtype, th):
    N, H, W, CP = y.shape
    T = H // th
    return pl.pallas_call(
        bn_relu_kernel,
        out_shape=jax.ShapeDtypeStruct((N, H, W, CP), out_dtype),
        grid_spec=pl.GridSpec(
            grid=(N, T),
            in_specs=[
                pl.BlockSpec((1, th, W, CP), lambda n, i: (n, i, 0, 0)),
                pl.BlockSpec((1, CP), lambda n, i: (0, 0)),
                pl.BlockSpec((1, CP), lambda n, i: (0, 0)),
            ],
            out_specs=pl.BlockSpec((1, th, W, CP), lambda n, i: (n, i, 0, 0)),
        ),
        compiler_params=pltpu.CompilerParams(
            dimension_semantics=("parallel", "parallel"),
            vmem_limit_bytes=VMEM_LIMIT),
    )(y, scale.reshape(1, CP), shift.reshape(1, CP))


def conv_bn_relu_stage(x_cp, w, gamma, beta, out_dtype):
    """One (Conv2d 3x3 pad=1 -> BatchNorm2d(train) -> ReLU) stage.

    x_cp : (N, H, W, CPin) bf16, channels zero-padded to a multiple of 128.
    w    : (3, 3, Cin, Cout) f32 conv weight.
    Returns (N, H, W, CPo) in out_dtype, channels zero-padded to CPo (padded lanes = 0).
    """
    N, H, W, CPin = x_cp.shape
    Cin, Cout = w.shape[2], w.shape[3]
    CPo = _round_up(Cout, LANES)
    th = TILE_H if H % TILE_H == 0 else H

    # Pack weights: (3,3,Cin,Cout) -> (9*CPin, CPo), zero-padded, bf16 for the MXU.
    w_p = jnp.zeros((3, 3, CPin, CPo), jnp.float32).at[:, :, :Cin, :Cout].set(w)
    w_p = w_p.reshape(9 * CPin, CPo).astype(jnp.bfloat16)

    # 1-px zero border for the 3x3 conv; bottom padded to a full extra row-tile so
    # the halo BlockSpec (block index i+1) stays in range.
    # TODO(synk): fold this 1-px border pad into the conv input DMA (Element-indexed
    # halo / manual async copy) so the padded copy never round-trips HBM.
    xp = jnp.pad(x_cp, ((0, 0), (1, th - 1), (1, 1), (0, 0)))

    y_conv, pstats = _conv3x3_tiled(xp, w_p, th)

    # Exact global BatchNorm batch statistics (tiny cross-tile reduction in JAX).
    cnt = jnp.float32(N * H * W)
    s1 = jnp.sum(pstats[:, :, 0, :], axis=(0, 1))          # (CPo,)
    s2 = jnp.sum(pstats[:, :, 1, :], axis=(0, 1))          # (CPo,)
    mean = s1 / cnt
    var = jnp.maximum(s2 / cnt - mean * mean, 0.0)          # biased variance
    g_p = jnp.zeros((CPo,), jnp.float32).at[:Cout].set(gamma)
    b_p = jnp.zeros((CPo,), jnp.float32).at[:Cout].set(beta)
    scale = g_p * jax.lax.rsqrt(var + EPS)
    shift = b_p - mean * scale                              # padded lanes stay zero

    return _bn_relu_tiled(y_conv, scale, shift, out_dtype, th)


# ------------------------------- JAX glue -------------------------------------
def _interp_matrix(n_in, n_out):
    """Row-stochastic bilinear interpolation matrix, align_corners=True."""
    if n_in == 1:
        return jnp.ones((n_out, 1), jnp.float32)
    pos = jnp.arange(n_out, dtype=jnp.float32) * (n_in - 1) / (n_out - 1)
    lo = jnp.clip(jnp.floor(pos).astype(jnp.int32), 0, n_in - 2)
    frac = pos - lo.astype(jnp.float32)
    rows = jnp.arange(n_out)
    m = jnp.zeros((n_out, n_in), jnp.float32)
    m = m.at[rows, lo].add(1.0 - frac)
    m = m.at[rows, lo + 1].add(frac)
    return m


def bilinear_upsample_x2(x_nchw):
    """nn.Upsample(scale_factor=2, mode='bilinear', align_corners=True)."""
    N, C, H, W = x_nchw.shape
    Rh = _interp_matrix(H, 2 * H)
    Rw = _interp_matrix(W, 2 * W)
    # TODO(synk): upsample / pad / concat / transpose remain fused XLA glue feeding
    # the Pallas hot path; they are not yet folded into the first conv's input DMA.
    return jnp.einsum('nchw,ih,jw->ncij', x_nchw, Rh, Rw)


@jax.jit
def up_forward(x1, x2, params):
    """Matches up.forward(x1, x2).  x1, x2 are NCHW (PyTorch convention)."""
    x1u = bilinear_upsample_x2(x1)
    diffY = x2.shape[2] - x1u.shape[2]
    diffX = x2.shape[3] - x1u.shape[3]
    x1p = jnp.pad(
        x1u,
        ((0, 0), (0, 0),
         (diffY // 2, diffY - diffY // 2),
         (diffX // 2, diffX - diffX // 2)))
    x = jnp.concatenate([x2, x1p], axis=1)               # NCHW, in_ch channels

    xh = jnp.transpose(x, (0, 2, 3, 1))                  # -> NHWC for the kernels
    N, H, W, Cin = xh.shape
    CPin = _round_up(Cin, LANES)
    x_cp = jnp.pad(xh, ((0, 0), (0, 0), (0, 0), (0, CPin - Cin))).astype(jnp.bfloat16)

    h1 = conv_bn_relu_stage(x_cp, params['w1'], params['g1'], params['be1'],
                            out_dtype=jnp.bfloat16)      # stays channel-padded bf16
    h2 = conv_bn_relu_stage(h1, params['w2'], params['g2'], params['be2'],
                            out_dtype=jnp.float32)

    Cout = params['w2'].shape[-1]
    return jnp.transpose(h2[..., :Cout], (0, 3, 1, 2))   # back to NCHW


def init_params(key, in_ch, out_ch):
    ks = jax.random.split(key, 4)
    return {
        # conv1: in_ch -> out_ch, 3x3  (stored as (3,3,Cin,Cout))
        'w1': 0.1 * jax.random.normal(ks[0], (3, 3, in_ch, out_ch), jnp.float32),
        'b1': 0.05 * jax.random.normal(ks[1], (out_ch,), jnp.float32),  # cancels under BN
        'g1': jnp.ones((out_ch,), jnp.float32),
        'be1': jnp.zeros((out_ch,), jnp.float32),
        # conv2: out_ch -> out_ch, 3x3
        'w2': 0.1 * jax.random.normal(ks[2], (3, 3, out_ch, out_ch), jnp.float32),
        'b2': 0.05 * jax.random.normal(ks[3], (out_ch,), jnp.float32),  # cancels under BN
        'g2': jnp.ones((out_ch,), jnp.float32),
        'be2': jnp.zeros((out_ch,), jnp.float32),
    }


if __name__ == "__main__":
    key = jax.random.PRNGKey(0)
    k1, k2, kp = jax.random.split(key, 3)

    in_ch, out_ch = 8, 8
    # Typical UNet up-block: x1 (coarse, in_ch//2 ch) + x2 (skip, in_ch//2 ch).
    x1 = jax.random.normal(k1, (2, in_ch // 2, 8, 8), jnp.float32)     # NCHW
    x2 = jax.random.normal(k2, (2, in_ch // 2, 16, 16), jnp.float32)   # NCHW

    params = init_params(kp, in_ch, out_ch)

    out = jax.block_until_ready(up_forward(x1, x2, params))

    assert out.shape == (2, out_ch, 16, 16), out.shape
    assert bool(jnp.all(jnp.isfinite(out)))
    assert bool(jnp.all(out >= 0.0))  # ends in ReLU

    print("KERNEL_OK")
</pallas_src>

<mosaic_0001>
module attributes {stable_mosaic.version = 11 : i64} {
  func.func @bn_relu_kernel(%arg0: i32, %arg1: i32, %arg2: memref<1x8x16x128xf32, #tpu.memory_space<vmem>>, %arg3: memref<1x128xf32, #tpu.memory_space<vmem>>, %arg4: memref<1x128xf32, #tpu.memory_space<vmem>>, %arg5: memref<1x8x16x128xbf16, #tpu.memory_space<vmem>>) attributes {dimension_semantics = [#tpu.dimension_semantics<parallel>, #tpu.dimension_semantics<parallel>], iteration_bounds = array<i64: 2, 2>, scalar_prefetch = 0 : i64, scratch_operands = 0 : i64, tpu.core_type = #tpu.core_type<tc>, window_params = [{transform_indices = @transform_0, window_bounds = array<i64: 1, 8, 16, 128>}, {pipeline_mode = #tpu.pipeline_mode<synchronous>, transform_indices = @transform_1, window_bounds = array<i64: 1, 128>}, {pipeline_mode = #tpu.pipeline_mode<synchronous>, transform_indices = @transform_2, window_bounds = array<i64: 1, 128>}, {transform_indices = @transform_3, window_bounds = array<i64: 1, 8, 16, 128>}]} {
    %c0 = arith.constant 0 : index
    %c0_0 = arith.constant 0 : index
    %c0_1 = arith.constant 0 : index
    %c0_2 = arith.constant 0 : index
    %0 = vector.load %arg2[%c0, %c0_0, %c0_1, %c0_2] : memref<1x8x16x128xf32, #tpu.memory_space<vmem>>, vector<1x8x16x128xf32>
    %c0_3 = arith.constant 0 : index
    %c0_4 = arith.constant 0 : index
    %1 = vector.load %arg3[%c0_3, %c0_4] : memref<1x128xf32, #tpu.memory_space<vmem>>, vector<1x128xf32>
    %2 = vector.shape_cast %1 : vector<1x128xf32> to vector<1x1x1x128xf32>
    %c0_5 = arith.constant 0 : index
    %c0_6 = arith.constant 0 : index
    %3 = vector.load %arg4[%c0_5, %c0_6] : memref<1x128xf32, #tpu.memory_space<vmem>>, vector<1x128xf32>
    %4 = vector.shape_cast %3 : vector<1x128xf32> to vector<1x1x1x128xf32>
    %5 = vector.broadcast %2 : vector<1x1x1x128xf32> to vector<1x8x16x128xf32>
    %6 = arith.mulf %0, %5 : vector<1x8x16x128xf32>
    %7 = vector.broadcast %4 : vector<1x1x1x128xf32> to vector<1x8x16x128xf32>
    %8 = arith.addf %6, %7 : vector<1x8x16x128xf32>
    %cst = arith.constant 0.000000e+00 : f32
    %9 = vector.broadcast %cst : f32 to vector<1x8x16x128xf32>
    %10 = arith.maximumf %8, %9 : vector<1x8x16x128xf32>
    %11 = arith.truncf %10 : vector<1x8x16x128xf32> to vector<1x8x16x128xbf16>
    %c0_7 = arith.constant 0 : index
    %c0_8 = arith.constant 0 : index
    %c0_9 = arith.constant 0 : index
    %c0_10 = arith.constant 0 : index
    %12 = vector.load %arg5[%c0_7, %c0_8, %c0_9, %c0_10] : memref<1x8x16x128xbf16, #tpu.memory_space<vmem>>, vector<1x8x16x128xbf16>
    tpu.vector_store %arg5[%c0_7, %c0_8, %c0_9, %c0_10], %11 {strides = array<i32>} : memref<1x8x16x128xbf16, #tpu.memory_space<vmem>>, vector<1x8x16x128xbf16>,
    return
  }
  func.func @transform_0(%arg0: i32, %arg1: i32) -> (i32, i32, i32, i32) {
    %c0_i32 = arith.constant 0 : i32
    %c0_i32_0 = arith.constant 0 : i32
    %c0_i32_1 = arith.constant 0 : i32
    return %arg0, %arg1, %c0_i32, %c0_i32_0 : i32, i32, i32, i32
  }
  func.func @transform_1(%arg0: i32, %arg1: i32) -> (i32, i32) {
    %c0_i32 = arith.constant 0 : i32
    %c0_i32_0 = arith.constant 0 : i32
    %c0_i32_1 = arith.constant 0 : i32
    return %c0_i32, %c0_i32_0 : i32, i32
  }
  func.func @transform_2(%arg0: i32, %arg1: i32) -> (i32, i32) {
    %c0_i32 = arith.constant 0 : i32
    %c0_i32_0 = arith.constant 0 : i32
    %c0_i32_1 = arith.constant 0 : i32
    return %c0_i32, %c0_i32_0 : i32, i32
  }
  func.func @transform_3(%arg0: i32, %arg1: i32) -> (i32, i32, i32, i32) {
    %c0_i32 = arith.constant 0 : i32
    %c0_i32_0 = arith.constant 0 : i32
    %c0_i32_1 = arith.constant 0 : i32
    return %arg0, %arg1, %c0_i32, %c0_i32_0 : i32, i32, i32, i32
  }
}

module attributes {stable_mosaic.version = 11 : i64} {
  func.func @conv3x3_stats_kernel(%arg0: i32, %arg1: i32, %arg2: memref<1x8x18x128xbf16, #tpu.memory_space<vmem>>, %arg3: memref<1x8x18x128xbf16, #tpu.memory_space<vmem>>, %arg4: memref<1152x128xbf16, #tpu.memory_space<vmem>>, %arg5: memref<1x8x16x128xf32, #tpu.memory_space<vmem>>, %arg6: memref<1x1x8x128xf32, #tpu.memory_space<vmem>>) attributes {dimension_semantics = [#tpu.dimension_semantics<parallel>, #tpu.dimension_semantics<parallel>], iteration_bounds = array<i64: 2, 2>, scalar_prefetch = 0 : i64, scratch_operands = 0 : i64, tpu.core_type = #tpu.core_type<tc>, window_params = [{transform_indices = @transform_0, window_bounds = array<i64: 1, 8, 18, 128>}, {transform_indices = @transform_1, window_bounds = array<i64: 1, 8, 18, 128>}, {pipeline_mode = #tpu.pipeline_mode<synchronous>, transform_indices = @transform_2, window_bounds = array<i64: 1152, 128>}, {transform_indices = @transform_3, window_bounds = array<i64: 1, 8, 16, 128>}, {transform_indices = @transform_4, window_bounds = array<i64: 1, 1, 8, 128>}]} {
    %c0 = arith.constant 0 : index
    %c0_0 = arith.constant 0 : index
    %c0_1 = arith.constant 0 : index
    %c0_2 = arith.constant 0 : index
    %0 = vector.load %arg2[%c0, %c0_0, %c0_1, %c0_2] : memref<1x8x18x128xbf16, #tpu.memory_space<vmem>>, vector<1x8x18x128xbf16>
    %1 = vector.shape_cast %0 : vector<1x8x18x128xbf16> to vector<8x18x128xbf16>
    %c0_3 = arith.constant 0 : index
    %c0_4 = arith.constant 0 : index
    %c0_5 = arith.constant 0 : index
    %c0_6 = arith.constant 0 : index
    %2 = vector.load %arg3[%c0_3, %c0_4, %c0_5, %c0_6] : memref<1x8x18x128xbf16, #tpu.memory_space<vmem>>, vector<1x8x18x128xbf16>
    %3 = vector.shape_cast %2 : vector<1x8x18x128xbf16> to vector<8x18x128xbf16>
    %4 = vector.extract_strided_slice %3 {offsets = [0, 0, 0], sizes = [2, 18, 128], strides = [1, 1, 1]} : vector<8x18x128xbf16> to vector<2x18x128xbf16>
    %5 = tpu.concatenate %1, %4 in 0 : vector<8x18x128xbf16>, vector<2x18x128xbf16> -> vector<10x18x128xbf16>
    %6 = vector.extract_strided_slice %5 {offsets = [0, 0, 0], sizes = [8, 16, 128], strides = [1, 1, 1]} : vector<10x18x128xbf16> to vector<8x16x128xbf16>
    %7 = vector.extract_strided_slice %5 {offsets = [0, 1, 0], sizes = [8, 16, 128], strides = [1, 1, 1]} : vector<10x18x128xbf16> to vector<8x16x128xbf16>
    %8 = vector.extract_strided_slice %5 {offsets = [0, 2, 0], sizes = [8, 16, 128], strides = [1, 1, 1]} : vector<10x18x128xbf16> to vector<8x16x128xbf16>
    %9 = vector.extract_strided_slice %5 {offsets = [1, 0, 0], sizes = [8, 16, 128], strides = [1, 1, 1]} : vector<10x18x128xbf16> to vector<8x16x128xbf16>
    %10 = vector.extract_strided_slice %5 {offsets = [1, 1, 0], sizes = [8, 16, 128], strides = [1, 1, 1]} : vector<10x18x128xbf16> to vector<8x16x128xbf16>
    %11 = vector.extract_strided_slice %5 {offsets = [1, 2, 0], sizes = [8, 16, 128], strides = [1, 1, 1]} : vector<10x18x128xbf16> to vector<8x16x128xbf16>
    %12 = vector.extract_strided_slice %5 {offsets = [2, 0, 0], sizes = [8, 16, 128], strides = [1, 1, 1]} : vector<10x18x128xbf16> to vector<8x16x128xbf16>
    %13 = vector.extract_strided_slice %5 {offsets = [2, 1, 0], sizes = [8, 16, 128], strides = [1, 1, 1]} : vector<10x18x128xbf16> to vector<8x16x128xbf16>
    %14 = vector.extract_strided_slice %5 {offsets = [2, 2, 0], sizes = [8, 16, 128], strides = [1, 1, 1]} : vector<10x18x128xbf16> to vector<8x16x128xbf16>
    %15 = tpu.concatenate %6, %7, %8, %9, %10, %11, %12, %13, %14 in 2 : vector<8x16x128xbf16>, vector<8x16x128xbf16>, vector<8x16x128xbf16>, vector<8x16x128xbf16>, vector<8x16x128xbf16>, vector<8x16x128xbf16>, vector<8x16x128xbf16>, vector<8x16x128xbf16>, vector<8x16x128xbf16> -> vector<8x16x1152xbf16>
    %16 = vector.shape_cast %15 : vector<8x16x1152xbf16> to vector<128x1152xbf16>
    %c0_7 = arith.constant 0 : index
    %c0_8 = arith.constant 0 : index
    %17 = vector.load %arg4[%c0_7, %c0_8] : memref<1152x128xbf16, #tpu.memory_space<vmem>>, vector<1152x128xbf16>
    %cst = arith.constant dense<0.000000e+00> : vector<128x128xf32>
    %18 = tpu.matmul %16, %17, %cst {dimension_numbers = #tpu.dot_dimension_numbers<[1], [0], [0], [1], [0, 0, 1, 1], [], []>} : vector<128x1152xbf16>, vector<1152x128xbf16>, vector<128x128xf32> -> vector<128x128xf32>
    %19 = vector.shape_cast %18 : vector<128x128xf32> to vector<1x8x16x128xf32>
    %c0_9 = arith.constant 0 : index
    %c0_10 = arith.constant 0 : index
    %c0_11 = arith.constant 0 : index
    %c0_12 = arith.constant 0 : index
    %20 = vector.load %arg5[%c0_9, %c0_10, %c0_11, %c0_12] : memref<1x8x16x128xf32, #tpu.memory_space<vmem>>, vector<1x8x16x128xf32>
    tpu.vector_store %arg5[%c0_9, %c0_10, %c0_11, %c0_12], %19 {strides = array<i32>} : memref<1x8x16x128xf32, #tpu.memory_space<vmem>>, vector<1x8x16x128xf32>,
    %cst_13 = arith.constant dense<0.000000e+00> : vector<128xf32>
    %21 = vector.multi_reduction <add>, %18, %cst_13 [0] : vector<128x128xf32> to vector<128xf32>
    %22 = vector.shape_cast %21 : vector<128xf32> to vector<1x128xf32>
    %23 = arith.mulf %18, %18 : vector<128x128xf32>
    %cst_14 = arith.constant dense<0.000000e+00> : vector<128xf32>
    %24 = vector.multi_reduction <add>, %23, %cst_14 [0] : vector<128x128xf32> to vector<128xf32>
    %25 = vector.shape_cast %24 : vector<128xf32> to vector<1x128xf32>
    %cst_15 = arith.constant 0.000000e+00 : f32
    %26 = vector.broadcast %cst_15 : f32 to vector<6x128xf32>
    %27 = tpu.concatenate %22, %25, %26 in 0 : vector<1x128xf32>, vector<1x128xf32>, vector<6x128xf32> -> vector<8x128xf32>
    %28 = vector.shape_cast %27 : vector<8x128xf32> to vector<1x1x8x128xf32>
    %c0_16 = arith.constant 0 : index
    %c0_17 = arith.constant 0 : index
    %c0_18 = arith.constant 0 : index
    %c0_19 = arith.constant 0 : index
    %29 = vector.load %arg6[%c0_16, %c0_17, %c0_18, %c0_19] : memref<1x1x8x128xf32, #tpu.memory_space<vmem>>, vector<1x1x8x128xf32>
    tpu.vector_store %arg6[%c0_16, %c0_17, %c0_18, %c0_19], %28 {strides = array<i32>} : memref<1x1x8x128xf32, #tpu.memory_space<vmem>>, vector<1x1x8x128xf32>,
    return
  }
  func.func @transform_0(%arg0: i32, %arg1: i32) -> (i32, i32, i32, i32) {
    %c0_i32 = arith.constant 0 : i32
    %c0_i32_0 = arith.constant 0 : i32
    %c0_i32_1 = arith.constant 0 : i32
    return %arg0, %arg1, %c0_i32, %c0_i32_0 : i32, i32, i32, i32
  }
  func.func @transform_1(%arg0: i32, %arg1: i32) -> (i32, i32, i32, i32) {
    %c1_i32 = arith.constant 1 : i32
    %0 = arith.addi %arg1, %c1_i32 : i32
    %c0_i32 = arith.constant 0 : i32
    %c0_i32_0 = arith.constant 0 : i32
    %c0_i32_1 = arith.constant 0 : i32
    return %arg0, %0, %c0_i32, %c0_i32_0 : i32, i32, i32, i32
  }
  func.func @transform_2(%arg0: i32, %arg1: i32) -> (i32, i32) {
    %c0_i32 = arith.constant 0 : i32
    %c0_i32_0 = arith.constant 0 : i32
    %c0_i32_1 = arith.constant 0 : i32
    return %c0_i32, %c0_i32_0 : i32, i32
  }
  func.func @transform_3(%arg0: i32, %arg1: i32) -> (i32, i32, i32, i32) {
    %c0_i32 = arith.constant 0 : i32
    %c0_i32_0 = arith.constant 0 : i32
    %c0_i32_1 = arith.constant 0 : i32
    return %arg0, %arg1, %c0_i32, %c0_i32_0 : i32, i32, i32, i32
  }
  func.func @transform_4(%arg0: i32, %arg1: i32) -> (i32, i32, i32, i32) {
    %c0_i32 = arith.constant 0 : i32
    %c0_i32_0 = arith.constant 0 : i32
    %c0_i32_1 = arith.constant 0 : i32
    return %arg0, %arg1, %c0_i32, %c0_i32_0 : i32, i32, i32, i32
  }
}

module attributes {stable_mosaic.version = 11 : i64} {
  func.func @bn_relu_kernel(%arg0: i32, %arg1: i32, %arg2: memref<1x8x16x128xf32, #tpu.memory_space<vmem>>, %arg3: memref<1x128xf32, #tpu.memory_space<vmem>>, %arg4: memref<1x128xf32, #tpu.memory_space<vmem>>, %arg5: memref<1x8x16x128xf32, #tpu.memory_space<vmem>>) attributes {dimension_semantics = [#tpu.dimension_semantics<parallel>, #tpu.dimension_semantics<parallel>], iteration_bounds = array<i64: 2, 2>, scalar_prefetch = 0 : i64, scratch_operands = 0 : i64, tpu.core_type = #tpu.core_type<tc>, window_params = [{transform_indices = @transform_0, window_bounds = array<i64: 1, 8, 16, 128>}, {pipeline_mode = #tpu.pipeline_mode<synchronous>, transform_indices = @transform_1, window_bounds = array<i64: 1, 128>}, {pipeline_mode = #tpu.pipeline_mode<synchronous>, transform_indices = @transform_2, window_bounds = array<i64: 1, 128>}, {transform_indices = @transform_3, window_bounds = array<i64: 1, 8, 16, 128>}]} {
    %c0 = arith.constant 0 : index
    %c0_0 = arith.constant 0 : index
    %c0_1 = arith.constant 0 : index
    %c0_2 = arith.constant 0 : index
    %0 = vector.load %arg2[%c0, %c0_0, %c0_1, %c0_2] : memref<1x8x16x128xf32, #tpu.memory_space<vmem>>, vector<1x8x16x128xf32>
    %c0_3 = arith.constant 0 : index
    %c0_4 = arith.constant 0 : index
    %1 = vector.load %arg3[%c0_3, %c0_4] : memref<1x128xf32, #tpu.memory_space<vmem>>, vector<1x128xf32>
    %2 = vector.shape_cast %1 : vector<1x128xf32> to vector<1x1x1x128xf32>
    %c0_5 = arith.constant 0 : index
    %c0_6 = arith.constant 0 : index
    %3 = vector.load %arg4[%c0_5, %c0_6] : memref<1x128xf32, #tpu.memory_space<vmem>>, vector<1x128xf32>
    %4 = vector.shape_cast %3 : vector<1x128xf32> to vector<1x1x1x128xf32>
    %5 = vector.broadcast %2 : vector<1x1x1x128xf32> to vector<1x8x16x128xf32>
    %6 = arith.mulf %0, %5 : vector<1x8x16x128xf32>
    %7 = vector.broadcast %4 : vector<1x1x1x128xf32> to vector<1x8x16x128xf32>
    %8 = arith.addf %6, %7 : vector<1x8x16x128xf32>
    %cst = arith.constant 0.000000e+00 : f32
    %9 = vector.broadcast %cst : f32 to vector<1x8x16x128xf32>
    %10 = arith.maximumf %8, %9 : vector<1x8x16x128xf32>
    %c0_7 = arith.constant 0 : index
    %c0_8 = arith.constant 0 : index
    %c0_9 = arith.constant 0 : index
    %c0_10 = arith.constant 0 : index
    %11 = vector.load %arg5[%c0_7, %c0_8, %c0_9, %c0_10] : memref<1x8x16x128xf32, #tpu.memory_space<vmem>>, vector<1x8x16x128xf32>
    tpu.vector_store %arg5[%c0_7, %c0_8, %c0_9, %c0_10], %10 {strides = array<i32>} : memref<1x8x16x128xf32, #tpu.memory_space<vmem>>, vector<1x8x16x128xf32>,
    return
  }
  func.func @transform_0(%arg0: i32, %arg1: i32) -> (i32, i32, i32, i32) {
    %c0_i32 = arith.constant 0 : i32
    %c0_i32_0 = arith.constant 0 : i32
    %c0_i32_1 = arith.constant 0 : i32
    return %arg0, %arg1, %c0_i32, %c0_i32_0 : i32, i32, i32, i32
  }
  func.func @transform_1(%arg0: i32, %arg1: i32) -> (i32, i32) {
    %c0_i32 = arith.constant 0 : i32
    %c0_i32_0 = arith.constant 0 : i32
    %c0_i32_1 = arith.constant 0 : i32
    return %c0_i32, %c0_i32_0 : i32, i32
  }
  func.func @transform_2(%arg0: i32, %arg1: i32) -> (i32, i32) {
    %c0_i32 = arith.constant 0 : i32
    %c0_i32_0 = arith.constant 0 : i32
    %c0_i32_1 = arith.constant 0 : i32
    return %c0_i32, %c0_i32_0 : i32, i32
  }
  func.func @transform_3(%arg0: i32, %arg1: i32) -> (i32, i32, i32, i32) {
    %c0_i32 = arith.constant 0 : i32
    %c0_i32_0 = arith.constant 0 : i32
    %c0_i32_1 = arith.constant 0 : i32
    return %arg0, %arg1, %c0_i32, %c0_i32_0 : i32, i32, i32, i32
  }
}

</mosaic_0001>

<llo_original>
// kernel: up_forward.5
$region0: #{up_forward.5}
  #allocation0 [shape = 'u32[]', space=smem, size = 0x4, offset = 0x4, fixed_abs, tag = 'smem constant byte address 0x4 - core index']
  #allocation1 [shape = 'u32[72,128]{1,0:T(1,128)}', space=vmem, size = 0x9000, scoped, tag = 'internal scratch']
  %s0 = inlined_call_operand.vmem [shape: f32[2,16,16,128], index: 0, kind: input, shape index: {}]
  %s1 = inlined_call_operand.vmem [shape: f32[1,128], index: 1, kind: input, shape index: {}]
  %s2 = inlined_call_operand.vmem [shape: f32[1,128], index: 2, kind: input, shape index: {}]
  %s3 = inlined_call_operand.vmem [shape: bf16[2,16,16,128], index: 3, kind: output, shape index: {}]
  %s4 = sld [smem:[#allocation0]]
  $region45: #{up_forward.5} parent=0
    _
  %s6 = ssub.s32 1, %s4
  %s7 = scalar_select 0, %s6, %s4
  loop: start=0, step=1, limit=6
  $region2: #{up_forward.5} parent=0 // loop_pre_header
    _
  $region3: #{up_forward.5} parent=0 // loop_header
    %s9 = sphi 0, %s13
    %p10 = scmp.ge.s32.totalorder %s9, 6
    %s16 = sphi 0, %s28
    %s17 = sphi 0, %s24
    %s18 = sphi 0, %s16
    %s19 = sphi 0, %s17
    %s20 = sphi 0, %s18
    %s21 = sphi 0, %s19
    %s33 = sphi 0, %s35
    %s36 = sphi 0, %s33
    %s37 = sphi 0, %s36
    %s53 = sphi 0, %s37
    %s57 = sphi 0, %s57
    %s59 = sphi 0, %s57
    %s60 = sphi 0, %s59
    %s74 = sphi 0, %s60
    %s78 = sphi 0, %s78
    %s80 = sphi 0, %s78
    %s81 = sphi 0, %s80
    %s95 = sphi 0, %s81
    %s103 = sphi 0, %s105
    %s106 = sphi 0, %s103
    %s107 = sphi 0, %s106
    %s123 = sphi 0, %s107
  $region4: #{up_forward.5} parent=0 // loop_header_branch
    %12 = sbr.rel (%p10) target = $region8
  $region5: #{up_forward.5} parent=0 // loop_body
    %s14 = ssub.s32 %s9, 1
    %s15 = ssub.s32 %s9, 2
    %s22 = sadd.s32 1, %s17
    %p23 = scmp.ge.s32.totalorder %s22, 2
    %s24 = scalar_select %p23, 0, %s22
    %s25 = sadd.s32 1, %s16
    %s26 = scalar_select %p23, %s25, %s16
    %p27 = scmp.ge.s32.totalorder %s26, 2
    %s28 = scalar_select %p27, 0, %s26
    %s29 = ssub.s32 %s16, %s28
    %s30 = ssub.s32 %s17, %s24
    %s31 = sor.u32 %s29, %s30
    %p32 = scmp.eq.s32.totalorder %s31, 0
    %s34 = sadd.s32 %s33, 1
    %s35 = scalar_select %p32, %s33, %s34
    %p38 = pneg %p32
    %p39 = scmp.eq.s32.totalorder %s9, 3
    %p40 = por %p38, %p39
    %p41 = scmp.ne.s32.totalorder %s33, %s36
    %p42 = scmp.eq.s32.totalorder %s9, 0
    %p43 = por %p41, %p42
    %p44 = scmp.ne.s32.totalorder %s33, %s36
    %p45 = scmp.eq.s32.totalorder %s14, 3
    %p46 = por %p44, %p45
    %p47 = scmp.ne.s32.totalorder %s36, %s37
    %p48 = scmp.eq.s32.totalorder %s14, 0
    %p49 = por %p47, %p48
    %p50 = scmp.ne.s32.totalorder %s36, %s37
    %p51 = scmp.eq.s32.totalorder %s15, 3
    %p52 = por %p50, %p51
    %p54 = scmp.ne.s32.totalorder %s37, %s53
    %p55 = scmp.eq.s32.totalorder %s15, 0
    %p56 = por %p54, %p55
    %s58 = sadd.s32 %s57, 1
    %p61 = scmp.eq.s32.totalorder %s9, 3
    %p62 = scmp.ne.s32.totalorder %s57, %s59
    %p63 = scmp.eq.s32.totalorder %s9, 0
    %p64 = por %p62, %p63
    %p65 = scmp.ne.s32.totalorder %s57, %s59
    %p66 = scmp.eq.s32.totalorder %s14, 3
    %p67 = por %p65, %p66
    %p68 = scmp.ne.s32.totalorder %s59, %s60
    %p69 = scmp.eq.s32.totalorder %s14, 0
    %p70 = por %p68, %p69
    %p71 = scmp.ne.s32.totalorder %s59, %s60
    %p72 = scmp.eq.s32.totalorder %s15, 3
    %p73 = por %p71, %p72
    %p75 = scmp.ne.s32.totalorder %s60, %s74
    %p76 = scmp.eq.s32.totalorder %s15, 0
    %p77 = por %p75, %p76
    %s79 = sadd.s32 %s78, 1
    %p82 = scmp.eq.s32.totalorder %s9, 3
    %p83 = scmp.ne.s32.totalorder %s78, %s80
    %p84 = scmp.eq.s32.totalorder %s9, 0
    %p85 = por %p83, %p84
    %p86 = scmp.ne.s32.totalorder %s78, %s80
    %p87 = scmp.eq.s32.totalorder %s14, 3
    %p88 = por %p86, %p87
    %p89 = scmp.ne.s32.totalorder %s80, %s81
    %p90 = scmp.eq.s32.totalorder %s14, 0
    %p91 = por %p89, %p90
    %p92 = scmp.ne.s32.totalorder %s80, %s81
    %p93 = scmp.eq.s32.totalorder %s15, 3
    %p94 = por %p92, %p93
    %p96 = scmp.ne.s32.totalorder %s81, %s95
    %p97 = scmp.eq.s32.totalorder %s15, 0
    %p98 = por %p96, %p97
    %s99 = ssub.s32 %s16, %s28
    %s100 = ssub.s32 %s17, %s24
    %s101 = sor.u32 %s99, %s100
    %p102 = scmp.eq.s32.totalorder %s101, 0
    %s104 = sadd.s32 %s103, 1
    %s105 = scalar_select %p102, %s103, %s104
    %p108 = pneg %p102
    %p109 = scmp.eq.s32.totalorder %s9, 3
    %p110 = por %p108, %p109
    %p111 = scmp.ne.s32.totalorder %s103, %s106
    %p112 = scmp.eq.s32.totalorder %s9, 0
    %p113 = por %p111, %p112
    %p114 = scmp.ne.s32.totalorder %s103, %s106
    %p115 = scmp.eq.s32.totalorder %s14, 3
    %p116 = por %p114, %p115
    %p117 = scmp.ne.s32.totalorder %s106, %s107
    %p118 = scmp.eq.s32.totalorder %s14, 0
    %p119 = por %p117, %p118
    %p120 = scmp.ne.s32.totalorder %s106, %s107
    %p121 = scmp.eq.s32.totalorder %s15, 3
    %p122 = por %p120, %p121
    %p124 = scmp.ne.s32.totalorder %s107, %s123
    %p125 = scmp.eq.s32.totalorder %s15, 0
    %p126 = por %p124, %p125
    %p127 = scmp.le.s32.totalorder 1, %s9
    %p128 = scmp.lt.s32.totalorder %s9, 5
    %p129 = pnand %p127, %p128
    %p130 = pneg %p129
    // Predicated region
    $region9: #{up_forward.5} parent=5 // pred_check
      _
    $region10: #{up_forward.5} parent=5 // pred_check_branch
      %132 = sbr.rel (%p129) target = $region12
    $region11: #{up_forward.5} parent=5 // pred_region
      %s133 = ssub.s32 %s9, 1
      // Predicated region
      $region13: #{up_forward.5} parent=11 // pred_check
        %p134 = pneg %p70
      $region14: #{up_forward.5} parent=11 // pred_check_branch
        %136 = sbr.rel (%p134) target = $region16
      $region15: #{up_forward.5} parent=11 // pred_region
        _
      $region16: #{up_forward.5} parent=11 // pred_fallthru
        _
      // Predicated region
      $region17: #{up_forward.5} parent=11 // pred_check
        %p137 = pneg %p91
      $region18: #{up_forward.5} parent=11 // pred_check_branch
        %139 = sbr.rel (%p137) target = $region20
      $region19: #{up_forward.5} parent=11 // pred_region
        _
      $region20: #{up_forward.5} parent=11 // pred_fallthru
        _
    $region12: #{up_forward.5} parent=5 // pred_fallthru
      _
    %p140 = scmp.lt.s32.totalorder %s9, 4
    // Predicated region
    $region21: #{up_forward.5} parent=5 // pred_check
      %p141 = pneg %p140
    $region22: #{up_forward.5} parent=5 // pred_check_branch
      %143 = sbr.rel (%p141) target = $region24
    $region23: #{up_forward.5} parent=5 // pred_region
      // Predicated region
      $region25: #{up_forward.5} parent=23 // pred_check
        %p144 = pneg %p43
      $region26: #{up_forward.5} parent=23 // pred_check_branch
        %146 = sbr.rel (%p144) target = $region28
      $region27: #{up_forward.5} parent=23 // pred_region
        %s147 = smul.u32 8, %s17
        %p148 = scmp.lt.s32.totalorder %s16, 1
        %s149 = scalar_select %p148, %s16, 1
        %p150 = scmp.lt.s32.totalorder %s147, 15
        %s151 = scalar_select %p150, %s147, 15
        %s152 = smul.addr %s151, 2
        %s153 = smul.addr %s149, 32
        %s154 = sadd.s32 %s152, %s153
        %s155 = smul.addr %s154, 8
        %s156 = scalar_lea.vmem %s0, %s155
        %s157 = smul.u32 8, %s17
      $region28: #{up_forward.5} parent=23 // pred_fallthru
        _
    $region24: #{up_forward.5} parent=5 // pred_fallthru
      _
    %p158 = scmp.le.s32.totalorder 1, %s9
    %p159 = scmp.lt.s32.totalorder %s9, 5
    %p160 = pnand %p158, %p159
    %p161 = pneg %p160
    // Predicated region
    $region29: #{up_forward.5} parent=5 // pred_check
      _
    $region30: #{up_forward.5} parent=5 // pred_check_branch
      %163 = sbr.rel (%p160) target = $region32
    $region31: #{up_forward.5} parent=5 // pred_region
      %s164 = ssub.s32 %s9, 1
      %s165 = smul.u32 8, %s19
      %p166 = scmp.lt.s32.totalorder %s18, 1
      %s167 = scalar_select %p166, %s18, 1
      %p168 = scmp.lt.s32.totalorder %s165, 15
      %s169 = scalar_select %p168, %s165, 15
      %s170 = smul.addr %s169, 2
      %s171 = smul.addr %s167, 32
      %s172 = sadd.s32 %s170, %s171
      %s173 = smul.addr %s172, 8
      %s174 = scalar_lea.vmem %s0, %s173
      %p175 = pneg %p49
      %p176 = pneg %p46
      %p177 = pneg %p70
      %p178 = pneg %p67
      %p179 = pneg %p91
      %p180 = pneg %p88
      %p181 = pneg %p119
      %p182 = pneg %p116
      %s183 = smul.u32 8, %s19
      %p184 = scmp.lt.s32.totalorder %s18, 1
      %s185 = scalar_select %p184, %s18, 1
      %p186 = scmp.lt.s32.totalorder %s183, 15
      %s187 = scalar_select %p186, %s183, 15
      %s188 = smul.addr %s187, 2
      %s189 = smul.addr %s185, 32
      %s190 = sadd.s32 %s188, %s189
      %s191 = smul.addr %s190, 4
      %s192 = scalar_lea.vmem %s3, %s191
      %s193 = smul.u32 8, %s19
      %p194 = scmp.lt.s32.totalorder %s18, 1
      %s195 = scalar_select %p194, %s18, 1
      %p196 = scmp.lt.s32.totalorder %s193, 15
      %s197 = scalar_select %p196, %s193, 15
      %s198 = smul.addr %s197, 2
      %s199 = smul.addr %s195, 32
      %s200 = sadd.s32 %s198, %s199
      %s201 = smul.addr %s200, 8
      %s202 = scalar_lea.vmem %s0, %s201
      %s203 = smul.u32 8, %s19
      %s204 = smul.u32 8, %s19
      %p205 = scmp.lt.s32.totalorder %s18, 1
      %s206 = scalar_select %p205, %s18, 1
      %p207 = scmp.lt.s32.totalorder %s204, 15
      %s208 = scalar_select %p207, %s204, 15
      %s209 = smul.addr %s208, 2
      %s210 = smul.addr %s206, 32
      %s211 = sadd.s32 %s209, %s210
      %s212 = smul.addr %s211, 4
      %s213 = scalar_lea.vmem %s3, %s212
      %s214 = smul.u32 8, %s19
      %v215 = vld [vmem:[%s202] sm:$0xff]
      %v216 = vld [vmem:[%s202 + $0x8] sm:$0xff]
      %v217 = vld [vmem:[%s202 + $0x10] sm:$0xff]
      %v218 = vld [vmem:[%s202 + $0x18] sm:$0xff]
      %v219 = vld [vmem:[%s202 + $0x20] sm:$0xff]
      %v220 = vld [vmem:[%s202 + $0x28] sm:$0xff]
      %v221 = vld [vmem:[%s202 + $0x30] sm:$0xff]
      %v222 = vld [vmem:[%s202 + $0x38] sm:$0xff]
      %v223 = vld [vmem:[%s202 + $0x40] sm:$0xff]
      %v224 = vld [vmem:[%s202 + $0x48] sm:$0xff]
      %v225 = vld [vmem:[%s202 + $0x50] sm:$0xff]
      %v226 = vld [vmem:[%s202 + $0x58] sm:$0xff]
      %v227 = vld [vmem:[%s202 + $0x60] sm:$0xff]
      %v228 = vld [vmem:[%s202 + $0x68] sm:$0xff]
      %v229 = vld [vmem:[%s202 + $0x70] sm:$0xff]
      %v230 = vld [vmem:[%s202 + $0x78] sm:$0xff]
      %v231 = vld [vmem:[%s1] sm:$0x1]
      %v232 = vld [vmem:[%s2] sm:$0x1]
      %v234 = vperm.slane %v231, 0
      %v236 = vmul.f32 %v215, %v234
      %v237 = vmul.f32 %v216, %v234
      %v238 = vmul.f32 %v217, %v234
      %v239 = vmul.f32 %v218, %v234
      %v240 = vmul.f32 %v219, %v234
      %v241 = vmul.f32 %v220, %v234
      %v242 = vmul.f32 %v221, %v234
      %v243 = vmul.f32 %v222, %v234
      %v244 = vmul.f32 %v223, %v234
      %v245 = vmul.f32 %v224, %v234
      %v246 = vmul.f32 %v225, %v234
      %v247 = vmul.f32 %v226, %v234
      %v248 = vmul.f32 %v227, %v234
      %v249 = vmul.f32 %v228, %v234
      %v250 = vmul.f32 %v229, %v234
      %v251 = vmul.f32 %v230, %v234
      %v253 = vperm.slane %v232, 0
      %v255 = vadd.f32 %v236, %v253
      %v256 = vadd.f32 %v237, %v253
      %v257 = vadd.f32 %v238, %v253
      %v258 = vadd.f32 %v239, %v253
      %v259 = vadd.f32 %v240, %v253
      %v260 = vadd.f32 %v241, %v253
      %v261 = vadd.f32 %v242, %v253
      %v262 = vadd.f32 %v243, %v253
      %v263 = vadd.f32 %v244, %v253
      %v264 = vadd.f32 %v245, %v253
      %v265 = vadd.f32 %v246, %v253
      %v266 = vadd.f32 %v247, %v253
      %v267 = vadd.f32 %v248, %v253
      %v268 = vadd.f32 %v249, %v253
      %v269 = vadd.f32 %v250, %v253
      %v270 = vadd.f32 %v251, %v253
      %v271 = vmax.f32 %v255, 0.0
      %v272 = vmax.f32 %v256, 0.0
      %v273 = vmax.f32 %v257, 0.0
      %v274 = vmax.f32 %v258, 0.0
      %v275 = vmax.f32 %v259, 0.0
      %v276 = vmax.f32 %v260, 0.0
      %v277 = vmax.f32 %v261, 0.0
      %v278 = vmax.f32 %v262, 0.0
      %v279 = vmax.f32 %v263, 0.0
      %v280 = vmax.f32 %v264, 0.0
      %v281 = vmax.f32 %v265, 0.0
      %v282 = vmax.f32 %v266, 0.0
      %v283 = vmax.f32 %v267, 0.0
      %v284 = vmax.f32 %v268, 0.0
      %v285 = vmax.f32 %v269, 0.0
      %v286 = vmax.f32 %v270, 0.0
      %v287 = vpack.c.bf16 %v271, %v271
      %v288 = vpack.c.bf16 %v272, %v272
      %v289 = vpack.c.bf16 %v273, %v273
      %v290 = vpack.c.bf16 %v274, %v274
      %v291 = vpack.c.bf16 %v275, %v275
      %v292 = vpack.c.bf16 %v276, %v276
      %v293 = vpack.c.bf16 %v277, %v277
      %v294 = vpack.c.bf16 %v278, %v278
      %v295 = vpack.c.bf16 %v279, %v279
      %v296 = vpack.c.bf16 %v280, %v280
      %v297 = vpack.c.bf16 %v281, %v281
      %v298 = vpack.c.bf16 %v282, %v282
      %v299 = vpack.c.bf16 %v283, %v283
      %v300 = vpack.c.bf16 %v284, %v284
      %v301 = vpack.c.bf16 %v285, %v285
      %v302 = vpack.c.bf16 %v286, %v286
      %303 = vst [vmem:[%s213] sm:$0xf] %v287
      %304 = vst [vmem:[%s213 + $0x4] sm:$0xf] %v288
      %305 = vst [vmem:[%s213 + $0x8] sm:$0xf] %v289
      %306 = vst [vmem:[%s213 + $0xc] sm:$0xf] %v290
      %307 = vst [vmem:[%s213 + $0x10] sm:$0xf] %v291
      %308 = vst [vmem:[%s213 + $0x14] sm:$0xf] %v292
      %309 = vst [vmem:[%s213 + $0x18] sm:$0xf] %v293
      %310 = vst [vmem:[%s213 + $0x1c] sm:$0xf] %v294
      %311 = vst [vmem:[%s213 + $0x20] sm:$0xf] %v295
      %312 = vst [vmem:[%s213 + $0x24] sm:$0xf] %v296
      %313 = vst [vmem:[%s213 + $0x28] sm:$0xf] %v297
      %314 = vst [vmem:[%s213 + $0x2c] sm:$0xf] %v298
      %315 = vst [vmem:[%s213 + $0x30] sm:$0xf] %v299
      %316 = vst [vmem:[%s213 + $0x34] sm:$0xf] %v300
      %317 = vst [vmem:[%s213 + $0x38] sm:$0xf] %v301
      %318 = vst [vmem:[%s213 + $0x3c] sm:$0xf] %v302
      %s319 = smul.u32 8, %s19
      %p320 = scmp.lt.s32.totalorder %s18, 1
      %s321 = scalar_select %p320, %s18, 1
      %p322 = scmp.lt.s32.totalorder %s319, 15
      %s323 = scalar_select %p322, %s319, 15
      %s324 = smul.addr %s323, 2
      %s325 = smul.addr %s321, 32
      %s326 = sadd.s32 %s324, %s325
      %s327 = smul.addr %s326, 4
      %s328 = scalar_lea.vmem %s3, %s327
      // Predicated region
      $region33: #{up_forward.5} parent=31 // pred_check
        %p329 = pneg %p116
      $region34: #{up_forward.5} parent=31 // pred_check_branch
        %331 = sbr.rel (%p329) target = $region36
      $region35: #{up_forward.5} parent=31 // pred_region
        %s332 = smul.u32 8, %s19
      $region36: #{up_forward.5} parent=31 // pred_fallthru
        _
    $region32: #{up_forward.5} parent=5 // pred_fallthru
      _
    %p333 = scmp.le.s32.totalorder 2, %s9
    // Predicated region
    $region37: #{up_forward.5} parent=5 // pred_check
      %p334 = pneg %p333
    $region38: #{up_forward.5} parent=5 // pred_check_branch
      %336 = sbr.rel (%p334) target = $region40
    $region39: #{up_forward.5} parent=5 // pred_region
      %s337 = ssub.s32 %s9, 2
      // Predicated region
      $region41: #{up_forward.5} parent=39 // pred_check
        %p338 = pneg %p122
      $region42: #{up_forward.5} parent=39 // pred_check_branch
        %340 = sbr.rel (%p338) target = $region44
      $region43: #{up_forward.5} parent=39 // pred_region
        %s341 = smul.u32 8, %s21
        %p342 = scmp.lt.s32.totalorder %s20, 1
        %s343 = scalar_select %p342, %s20, 1
        %p344 = scmp.lt.s32.totalorder %s341, 15
        %s345 = scalar_select %p344, %s341, 15
        %s346 = smul.addr %s345, 2
        %s347 = smul.addr %s343, 32
        %s348 = sadd.s32 %s346, %s347
        %s349 = smul.addr %s348, 4
        %s350 = scalar_lea.vmem %s3, %s349
      $region44: #{up_forward.5} parent=39 // pred_fallthru
        _
    $region40: #{up_forward.5} parent=5 // pred_fallthru
      _
  $region6: #{up_forward.5} parent=0 // loop_footer
    %s13 = sadd.s32 1, %s9
  $region7: #{up_forward.5} parent=0 // loop_footer_branch
    %8 = sbr.rel target = $region3
  $region8: #{up_forward.5} parent=0 // loop_exit
    _

// kernel: up_forward.7
$region0: #{up_forward.7}
  #allocation0 [shape = 'u32[]', space=smem, size = 0x4, offset = 0x4, fixed_abs, tag = 'smem constant byte address 0x4 - core index']
  #allocation1 [shape = 'u32[72,128]{1,0:T(1,128)}', space=vmem, size = 0x9000, scoped, tag = 'internal scratch']
  %s0 = inlined_call_operand.vmem [shape: f32[2,16,16,128], index: 0, kind: input, shape index: {}]
  %s1 = inlined_call_operand.vmem [shape: f32[1,128], index: 1, kind: input, shape index: {}]
  %s2 = inlined_call_operand.vmem [shape: f32[1,128], index: 2, kind: input, shape index: {}]
  %s3 = inlined_call_operand.vmem [shape: f32[2,16,16,128], index: 3, kind: output, shape index: {}]
  %s4 = sld [smem:[#allocation0]]
  $region45: #{up_forward.7} parent=0
    _
  %s6 = ssub.s32 1, %s4
  %s7 = scalar_select 0, %s6, %s4
  loop: start=0, step=1, limit=6
  $region2: #{up_forward.7} parent=0 // loop_pre_header
    _
  $region3: #{up_forward.7} parent=0 // loop_header
    %s9 = sphi 0, %s13
    %p10 = scmp.ge.s32.totalorder %s9, 6
    %s16 = sphi 0, %s28
    %s17 = sphi 0, %s24
    %s18 = sphi 0, %s16
    %s19 = sphi 0, %s17
    %s20 = sphi 0, %s18
    %s21 = sphi 0, %s19
    %s33 = sphi 0, %s35
    %s36 = sphi 0, %s33
    %s37 = sphi 0, %s36
    %s53 = sphi 0, %s37
    %s57 = sphi 0, %s57
    %s59 = sphi 0, %s57
    %s60 = sphi 0, %s59
    %s74 = sphi 0, %s60
    %s78 = sphi 0, %s78
    %s80 = sphi 0, %s78
    %s81 = sphi 0, %s80
    %s95 = sphi 0, %s81
    %s103 = sphi 0, %s105
    %s106 = sphi 0, %s103
    %s107 = sphi 0, %s106
    %s123 = sphi 0, %s107
  $region4: #{up_forward.7} parent=0 // loop_header_branch
    %12 = sbr.rel (%p10) target = $region8
  $region5: #{up_forward.7} parent=0 // loop_body
    %s14 = ssub.s32 %s9, 1
    %s15 = ssub.s32 %s9, 2
    %s22 = sadd.s32 1, %s17
    %p23 = scmp.ge.s32.totalorder %s22, 2
    %s24 = scalar_select %p23, 0, %s22
    %s25 = sadd.s32 1, %s16
    %s26 = scalar_select %p23, %s25, %s16
    %p27 = scmp.ge.s32.totalorder %s26, 2
    %s28 = scalar_select %p27, 0, %s26
    %s29 = ssub.s32 %s16, %s28
    %s30 = ssub.s32 %s17, %s24
    %s31 = sor.u32 %s29, %s30
    %p32 = scmp.eq.s32.totalorder %s31, 0
    %s34 = sadd.s32 %s33, 1
    %s35 = scalar_select %p32, %s33, %s34
    %p38 = pneg %p32
    %p39 = scmp.eq.s32.totalorder %s9, 3
    %p40 = por %p38, %p39
    %p41 = scmp.ne.s32.totalorder %s33, %s36
    %p42 = scmp.eq.s32.totalorder %s9, 0
    %p43 = por %p41, %p42
    %p44 = scmp.ne.s32.totalorder %s33, %s36
    %p45 = scmp.eq.s32.totalorder %s14, 3
    %p46 = por %p44, %p45
    %p47 = scmp.ne.s32.totalorder %s36, %s37
    %p48 = scmp.eq.s32.totalorder %s14, 0
    %p49 = por %p47, %p48
    %p50 = scmp.ne.s32.totalorder %s36, %s37
    %p51 = scmp.eq.s32.totalorder %s15, 3
    %p52 = por %p50, %p51
    %p54 = scmp.ne.s32.totalorder %s37, %s53
    %p55 = scmp.eq.s32.totalorder %s15, 0
    %p56 = por %p54, %p55
    %s58 = sadd.s32 %s57, 1
    %p61 = scmp.eq.s32.totalorder %s9, 3
    %p62 = scmp.ne.s32.totalorder %s57, %s59
    %p63 = scmp.eq.s32.totalorder %s9, 0
    %p64 = por %p62, %p63
    %p65 = scmp.ne.s32.totalorder %s57, %s59
    %p66 = scmp.eq.s32.totalorder %s14, 3
    %p67 = por %p65, %p66
    %p68 = scmp.ne.s32.totalorder %s59, %s60
    %p69 = scmp.eq.s32.totalorder %s14, 0
    %p70 = por %p68, %p69
    %p71 = scmp.ne.s32.totalorder %s59, %s60
    %p72 = scmp.eq.s32.totalorder %s15, 3
    %p73 = por %p71, %p72
    %p75 = scmp.ne.s32.totalorder %s60, %s74
    %p76 = scmp.eq.s32.totalorder %s15, 0
    %p77 = por %p75, %p76
    %s79 = sadd.s32 %s78, 1
    %p82 = scmp.eq.s32.totalorder %s9, 3
    %p83 = scmp.ne.s32.totalorder %s78, %s80
    %p84 = scmp.eq.s32.totalorder %s9, 0
    %p85 = por %p83, %p84
    %p86 = scmp.ne.s32.totalorder %s78, %s80
    %p87 = scmp.eq.s32.totalorder %s14, 3
    %p88 = por %p86, %p87
    %p89 = scmp.ne.s32.totalorder %s80, %s81
    %p90 = scmp.eq.s32.totalorder %s14, 0
    %p91 = por %p89, %p90
    %p92 = scmp.ne.s32.totalorder %s80, %s81
    %p93 = scmp.eq.s32.totalorder %s15, 3
    %p94 = por %p92, %p93
    %p96 = scmp.ne.s32.totalorder %s81, %s95
    %p97 = scmp.eq.s32.totalorder %s15, 0
    %p98 = por %p96, %p97
    %s99 = ssub.s32 %s16, %s28
    %s100 = ssub.s32 %s17, %s24
    %s101 = sor.u32 %s99, %s100
    %p102 = scmp.eq.s32.totalorder %s101, 0
    %s104 = sadd.s32 %s103, 1
    %s105 = scalar_select %p102, %s103, %s104
    %p108 = pneg %p102
    %p109 = scmp.eq.s32.totalorder %s9, 3
    %p110 = por %p108, %p109
    %p111 = scmp.ne.s32.totalorder %s103, %s106
    %p112 = scmp.eq.s32.totalorder %s9, 0
    %p113 = por %p111, %p112
    %p114 = scmp.ne.s32.totalorder %s103, %s106
    %p115 = scmp.eq.s32.totalorder %s14, 3
    %p116 = por %p114, %p115
    %p117 = scmp.ne.s32.totalorder %s106, %s107
    %p118 = scmp.eq.s32.totalorder %s14, 0
    %p119 = por %p117, %p118
    %p120 = scmp.ne.s32.totalorder %s106, %s107
    %p121 = scmp.eq.s32.totalorder %s15, 3
    %p122 = por %p120, %p121
    %p124 = scmp.ne.s32.totalorder %s107, %s123
    %p125 = scmp.eq.s32.totalorder %s15, 0
    %p126 = por %p124, %p125
    %p127 = scmp.le.s32.totalorder 1, %s9
    %p128 = scmp.lt.s32.totalorder %s9, 5
    %p129 = pnand %p127, %p128
    %p130 = pneg %p129
    // Predicated region
    $region9: #{up_forward.7} parent=5 // pred_check
      _
    $region10: #{up_forward.7} parent=5 // pred_check_branch
      %132 = sbr.rel (%p129) target = $region12
    $region11: #{up_forward.7} parent=5 // pred_region
      %s133 = ssub.s32 %s9, 1
      // Predicated region
      $region13: #{up_forward.7} parent=11 // pred_check
        %p134 = pneg %p70
      $region14: #{up_forward.7} parent=11 // pred_check_branch
        %136 = sbr.rel (%p134) target = $region16
      $region15: #{up_forward.7} parent=11 // pred_region
        _
      $region16: #{up_forward.7} parent=11 // pred_fallthru
        _
      // Predicated region
      $region17: #{up_forward.7} parent=11 // pred_check
        %p137 = pneg %p91
      $region18: #{up_forward.7} parent=11 // pred_check_branch
        %139 = sbr.rel (%p137) target = $region20
      $region19: #{up_forward.7} parent=11 // pred_region
        _
      $region20: #{up_forward.7} parent=11 // pred_fallthru
        _
    $region12: #{up_forward.7} parent=5 // pred_fallthru
      _
    %p140 = scmp.lt.s32.totalorder %s9, 4
    // Predicated region
    $region21: #{up_forward.7} parent=5 // pred_check
      %p141 = pneg %p140
    $region22: #{up_forward.7} parent=5 // pred_check_branch
      %143 = sbr.rel (%p141) target = $region24
    $region23: #{up_forward.7} parent=5 // pred_region
      // Predicated region
      $region25: #{up_forward.7} parent=23 // pred_check
        %p144 = pneg %p43
      $region26: #{up_forward.7} parent=23 // pred_check_branch
        %146 = sbr.rel (%p144) target = $region28
      $region27: #{up_forward.7} parent=23 // pred_region
        %s147 = smul.u32 8, %s17
        %p148 = scmp.lt.s32.totalorder %s16, 1
        %s149 = scalar_select %p148, %s16, 1
        %p150 = scmp.lt.s32.totalorder %s147, 15
        %s151 = scalar_select %p150, %s147, 15
        %s152 = smul.addr %s151, 2
        %s153 = smul.addr %s149, 32
        %s154 = sadd.s32 %s152, %s153
        %s155 = smul.addr %s154, 8
        %s156 = scalar_lea.vmem %s0, %s155
        %s157 = smul.u32 8, %s17
      $region28: #{up_forward.7} parent=23 // pred_fallthru
        _
    $region24: #{up_forward.7} parent=5 // pred_fallthru
      _
    %p158 = scmp.le.s32.totalorder 1, %s9
    %p159 = scmp.lt.s32.totalorder %s9, 5
    %p160 = pnand %p158, %p159
    %p161 = pneg %p160
    // Predicated region
    $region29: #{up_forward.7} parent=5 // pred_check
      _
    $region30: #{up_forward.7} parent=5 // pred_check_branch
      %163 = sbr.rel (%p160) target = $region32
    $region31: #{up_forward.7} parent=5 // pred_region
      %s164 = ssub.s32 %s9, 1
      %s165 = smul.u32 8, %s19
      %p166 = scmp.lt.s32.totalorder %s18, 1
      %s167 = scalar_select %p166, %s18, 1
      %p168 = scmp.lt.s32.totalorder %s165, 15
      %s169 = scalar_select %p168, %s165, 15
      %s170 = smul.addr %s169, 2
      %s171 = smul.addr %s167, 32
      %s172 = sadd.s32 %s170, %s171
      %s173 = smul.addr %s172, 8
      %s174 = scalar_lea.vmem %s0, %s173
      %p175 = pneg %p49
      %p176 = pneg %p46
      %p177 = pneg %p70
      %p178 = pneg %p67
      %p179 = pneg %p91
      %p180 = pneg %p88
      %p181 = pneg %p119
      %p182 = pneg %p116
      %s183 = smul.u32 8, %s19
      %p184 = scmp.lt.s32.totalorder %s18, 1
      %s185 = scalar_select %p184, %s18, 1
      %p186 = scmp.lt.s32.totalorder %s183, 15
      %s187 = scalar_select %p186, %s183, 15
      %s188 = smul.addr %s187, 2
      %s189 = smul.addr %s185, 32
      %s190 = sadd.s32 %s188, %s189
      %s191 = smul.addr %s190, 8
      %s192 = scalar_lea.vmem %s3, %s191
      %s193 = smul.u32 8, %s19
      %p194 = scmp.lt.s32.totalorder %s18, 1
      %s195 = scalar_select %p194, %s18, 1
      %p196 = scmp.lt.s32.totalorder %s193, 15
      %s197 = scalar_select %p196, %s193, 15
      %s198 = smul.addr %s197, 2
      %s199 = smul.addr %s195, 32
      %s200 = sadd.s32 %s198, %s199
      %s201 = smul.addr %s200, 8
      %s202 = scalar_lea.vmem %s0, %s201
      %s203 = smul.u32 8, %s19
      %s204 = smul.u32 8, %s19
      %p205 = scmp.lt.s32.totalorder %s18, 1
      %s206 = scalar_select %p205, %s18, 1
      %p207 = scmp.lt.s32.totalorder %s204, 15
      %s208 = scalar_select %p207, %s204, 15
      %s209 = smul.addr %s208, 2
      %s210 = smul.addr %s206, 32
      %s211 = sadd.s32 %s209, %s210
      %s212 = smul.addr %s211, 8
      %s213 = scalar_lea.vmem %s3, %s212
      %s214 = smul.u32 8, %s19
      %v215 = vld [vmem:[%s202] sm:$0xff]
      %v216 = vld [vmem:[%s202 + $0x8] sm:$0xff]
      %v217 = vld [vmem:[%s202 + $0x10] sm:$0xff]
      %v218 = vld [vmem:[%s202 + $0x18] sm:$0xff]
      %v219 = vld [vmem:[%s202 + $0x20] sm:$0xff]
      %v220 = vld [vmem:[%s202 + $0x28] sm:$0xff]
      %v221 = vld [vmem:[%s202 + $0x30] sm:$0xff]
      %v222 = vld [vmem:[%s202 + $0x38] sm:$0xff]
      %v223 = vld [vmem:[%s202 + $0x40] sm:$0xff]
      %v224 = vld [vmem:[%s202 + $0x48] sm:$0xff]
      %v225 = vld [vmem:[%s202 + $0x50] sm:$0xff]
      %v226 = vld [vmem:[%s202 + $0x58] sm:$0xff]
      %v227 = vld [vmem:[%s202 + $0x60] sm:$0xff]
      %v228 = vld [vmem:[%s202 + $0x68] sm:$0xff]
      %v229 = vld [vmem:[%s202 + $0x70] sm:$0xff]
      %v230 = vld [vmem:[%s202 + $0x78] sm:$0xff]
      %v231 = vld [vmem:[%s1] sm:$0x1]
      %v232 = vld [vmem:[%s2] sm:$0x1]
      %v234 = vperm.slane %v231, 0
      %v236 = vmul.f32 %v215, %v234
      %v237 = vmul.f32 %v216, %v234
      %v238 = vmul.f32 %v217, %v234
      %v239 = vmul.f32 %v218, %v234
      %v240 = vmul.f32 %v219, %v234
      %v241 = vmul.f32 %v220, %v234
      %v242 = vmul.f32 %v221, %v234
      %v243 = vmul.f32 %v222, %v234
      %v244 = vmul.f32 %v223, %v234
      %v245 = vmul.f32 %v224, %v234
      %v246 = vmul.f32 %v225, %v234
      %v247 = vmul.f32 %v226, %v234
      %v248 = vmul.f32 %v227, %v234
      %v249 = vmul.f32 %v228, %v234
      %v250 = vmul.f32 %v229, %v234
      %v251 = vmul.f32 %v230, %v234
      %v253 = vperm.slane %v232, 0
      %v255 = vadd.f32 %v236, %v253
      %v256 = vadd.f32 %v237, %v253
      %v257 = vadd.f32 %v238, %v253
      %v258 = vadd.f32 %v239, %v253
      %v259 = vadd.f32 %v240, %v253
      %v260 = vadd.f32 %v241, %v253
      %v261 = vadd.f32 %v242, %v253
      %v262 = vadd.f32 %v243, %v253
      %v263 = vadd.f32 %v244, %v253
      %v264 = vadd.f32 %v245, %v253
      %v265 = vadd.f32 %v246, %v253
      %v266 = vadd.f32 %v247, %v253
      %v267 = vadd.f32 %v248, %v253
      %v268 = vadd.f32 %v249, %v253
      %v269 = vadd.f32 %v250, %v253
      %v270 = vadd.f32 %v251, %v253
      %v271 = vmax.f32 %v255, 0.0
      %v272 = vmax.f32 %v256, 0.0
      %v273 = vmax.f32 %v257, 0.0
      %v274 = vmax.f32 %v258, 0.0
      %v275 = vmax.f32 %v259, 0.0
      %v276 = vmax.f32 %v260, 0.0
      %v277 = vmax.f32 %v261, 0.0
      %v278 = vmax.f32 %v262, 0.0
      %v279 = vmax.f32 %v263, 0.0
      %v280 = vmax.f32 %v264, 0.0
      %v281 = vmax.f32 %v265, 0.0
      %v282 = vmax.f32 %v266, 0.0
      %v283 = vmax.f32 %v267, 0.0
      %v284 = vmax.f32 %v268, 0.0
      %v285 = vmax.f32 %v269, 0.0
      %v286 = vmax.f32 %v270, 0.0
      %287 = vst [vmem:[%s213] sm:$0xff] %v271
      %288 = vst [vmem:[%s213 + $0x8] sm:$0xff] %v272
      %289 = vst [vmem:[%s213 + $0x10] sm:$0xff] %v273
      %290 = vst [vmem:[%s213 + $0x18] sm:$0xff] %v274
      %291 = vst [vmem:[%s213 + $0x20] sm:$0xff] %v275
      %292 = vst [vmem:[%s213 + $0x28] sm:$0xff] %v276
      %293 = vst [vmem:[%s213 + $0x30] sm:$0xff] %v277
      %294 = vst [vmem:[%s213 + $0x38] sm:$0xff] %v278
      %295 = vst [vmem:[%s213 + $0x40] sm:$0xff] %v279
      %296 = vst [vmem:[%s213 + $0x48] sm:$0xff] %v280
      %297 = vst [vmem:[%s213 + $0x50] sm:$0xff] %v281
      %298 = vst [vmem:[%s213 + $0x58] sm:$0xff] %v282
      %299 = vst [vmem:[%s213 + $0x60] sm:$0xff] %v283
      %300 = vst [vmem:[%s213 + $0x68] sm:$0xff] %v284
      %301 = vst [vmem:[%s213 + $0x70] sm:$0xff] %v285
      %302 = vst [vmem:[%s213 + $0x78] sm:$0xff] %v286
      %s303 = smul.u32 8, %s19
      %p304 = scmp.lt.s32.totalorder %s18, 1
      %s305 = scalar_select %p304, %s18, 1
      %p306 = scmp.lt.s32.totalorder %s303, 15
      %s307 = scalar_select %p306, %s303, 15
      %s308 = smul.addr %s307, 2
      %s309 = smul.addr %s305, 32
      %s310 = sadd.s32 %s308, %s309
      %s311 = smul.addr %s310, 8
      %s312 = scalar_lea.vmem %s3, %s311
      // Predicated region
      $region33: #{up_forward.7} parent=31 // pred_check
        %p313 = pneg %p116
      $region34: #{up_forward.7} parent=31 // pred_check_branch
        %315 = sbr.rel (%p313) target = $region36
      $region35: #{up_forward.7} parent=31 // pred_region
        %s316 = smul.u32 8, %s19
      $region36: #{up_forward.7} parent=31 // pred_fallthru
        _
    $region32: #{up_forward.7} parent=5 // pred_fallthru
      _
    %p317 = scmp.le.s32.totalorder 2, %s9
    // Predicated region
    $region37: #{up_forward.7} parent=5 // pred_check
      %p318 = pneg %p317
    $region38: #{up_forward.7} parent=5 // pred_check_branch
      %320 = sbr.rel (%p318) target = $region40
    $region39: #{up_forward.7} parent=5 // pred_region
      %s321 = ssub.s32 %s9, 2
      // Predicated region
      $region41: #{up_forward.7} parent=39 // pred_check
        %p322 = pneg %p122
      $region42: #{up_forward.7} parent=39 // pred_check_branch
        %324 = sbr.rel (%p322) target = $region44
      $region43: #{up_forward.7} parent=39 // pred_region
        %s325 = smul.u32 8, %s21
        %p326 = scmp.lt.s32.totalorder %s20, 1
        %s327 = scalar_select %p326, %s20, 1
        %p328 = scmp.lt.s32.totalorder %s325, 15
        %s329 = scalar_select %p328, %s325, 15
        %s330 = smul.addr %s329, 2
        %s331 = smul.addr %s327, 32
        %s332 = sadd.s32 %s330, %s331
        %s333 = smul.addr %s332, 8
        %s334 = scalar_lea.vmem %s3, %s333
      $region44: #{up_forward.7} parent=39 // pred_fallthru
        _
    $region40: #{up_forward.7} parent=5 // pred_fallthru
      _
  $region6: #{up_forward.7} parent=0 // loop_footer
    %s13 = sadd.s32 1, %s9
  $region7: #{up_forward.7} parent=0 // loop_footer_branch
    %8 = sbr.rel target = $region3
  $region8: #{up_forward.7} parent=0 // loop_exit
    _

// kernel: up_forward.4
$region0: #{up_forward.4}
  #allocation0 [shape = 'u32[]', space=smem, size = 0x4, offset = 0x4, fixed_abs, tag = 'smem constant byte address 0x4 - core index']
  #allocation1 [shape = 'u32[72,128]{1,0:T(1,128)}', space=vmem, size = 0x9000, scoped, tag = 'internal scratch']
  %s0 = inlined_call_operand.vmem [shape: bf16[2,24,18,128], index: 0, kind: input, shape index: {}, may-alias: {0,1}]
  %s1 = inlined_call_operand.vmem [shape: bf16[2,24,18,128], index: 1, kind: input, shape index: {}, may-alias: {0,1}]
  %s2 = inlined_call_operand.vmem [shape: bf16[1152,128], index: 2, kind: input, shape index: {}]
  %s3 = inlined_call_operand.vmem [shape: f32[2,16,16,128], index: 3, kind: output, shape index: {0}]
  %s4 = inlined_call_operand.vmem [shape: f32[2,2,8,128], index: 4, kind: output, shape index: {1}]
  %5 = xla_tuple %s3, %s4
  %s6 = sld [smem:[#allocation0]]
  $region53: #{up_forward.4} parent=0
    _
  %s8 = ssub.s32 1, %s6
  %s9 = scalar_select 0, %s8, %s6
  loop: start=0, step=1, limit=6
  $region2: #{up_forward.4} parent=0 // loop_pre_header
    _
  $region3: #{up_forward.4} parent=0 // loop_header
    %s11 = sphi 0, %s15
    %p12 = scmp.ge.s32.totalorder %s11, 6
    %s18 = sphi 0, %s30
    %s19 = sphi 0, %s26
    %s20 = sphi 0, %s18
    %s21 = sphi 0, %s19
    %s22 = sphi 0, %s20
    %s23 = sphi 0, %s21
    %s35 = sphi 0, %s37
    %s38 = sphi 0, %s35
    %s39 = sphi 0, %s38
    %s55 = sphi 0, %s39
    %s65 = sphi 0, %s67
    %s68 = sphi 0, %s65
    %s69 = sphi 0, %s68
    %s85 = sphi 0, %s69
    %s89 = sphi 0, %s89
    %s91 = sphi 0, %s89
    %s92 = sphi 0, %s91
    %s106 = sphi 0, %s92
    %s114 = sphi 0, %s116
    %s117 = sphi 0, %s114
    %s118 = sphi 0, %s117
    %s134 = sphi 0, %s118
    %s142 = sphi 0, %s144
    %s145 = sphi 0, %s142
    %s146 = sphi 0, %s145
    %s162 = sphi 0, %s146
  $region4: #{up_forward.4} parent=0 // loop_header_branch
    %14 = sbr.rel (%p12) target = $region8
  $region5: #{up_forward.4} parent=0 // loop_body
    %s16 = ssub.s32 %s11, 1
    %s17 = ssub.s32 %s11, 2
    %s24 = sadd.s32 1, %s19
    %p25 = scmp.ge.s32.totalorder %s24, 2
    %s26 = scalar_select %p25, 0, %s24
    %s27 = sadd.s32 1, %s18
    %s28 = scalar_select %p25, %s27, %s18
    %p29 = scmp.ge.s32.totalorder %s28, 2
    %s30 = scalar_select %p29, 0, %s28
    %s31 = ssub.s32 %s18, %s30
    %s32 = ssub.s32 %s19, %s26
    %s33 = sor.u32 %s31, %s32
    %p34 = scmp.eq.s32.totalorder %s33, 0
    %s36 = sadd.s32 %s35, 1
    %s37 = scalar_select %p34, %s35, %s36
    %p40 = pneg %p34
    %p41 = scmp.eq.s32.totalorder %s11, 3
    %p42 = por %p40, %p41
    %p43 = scmp.ne.s32.totalorder %s35, %s38
    %p44 = scmp.eq.s32.totalorder %s11, 0
    %p45 = por %p43, %p44
    %p46 = scmp.ne.s32.totalorder %s35, %s38
    %p47 = scmp.eq.s32.totalorder %s16, 3
    %p48 = por %p46, %p47
    %p49 = scmp.ne.s32.totalorder %s38, %s39
    %p50 = scmp.eq.s32.totalorder %s16, 0
    %p51 = por %p49, %p50
    %p52 = scmp.ne.s32.totalorder %s38, %s39
    %p53 = scmp.eq.s32.totalorder %s17, 3
    %p54 = por %p52, %p53
    %p56 = scmp.ne.s32.totalorder %s39, %s55
    %p57 = scmp.eq.s32.totalorder %s17, 0
    %p58 = por %p56, %p57
    %s59 = sadd.s32 %s19, 1
    %s60 = sadd.s32 %s26, 1
    %s61 = ssub.s32 %s18, %s30
    %s62 = ssub.s32 %s59, %s60
    %s63 = sor.u32 %s61, %s62
    %p64 = scmp.eq.s32.totalorder %s63, 0
    %s66 = sadd.s32 %s65, 1
    %s67 = scalar_select %p64, %s65, %s66
    %p70 = pneg %p64
    %p71 = scmp.eq.s32.totalorder %s11, 3
    %p72 = por %p70, %p71
    %p73 = scmp.ne.s32.totalorder %s65, %s68
    %p74 = scmp.eq.s32.totalorder %s11, 0
    %p75 = por %p73, %p74
    %p76 = scmp.ne.s32.totalorder %s65, %s68
    %p77 = scmp.eq.s32.totalorder %s16, 3
    %p78 = por %p76, %p77
    %p79 = scmp.ne.s32.totalorder %s68, %s69
    %p80 = scmp.eq.s32.totalorder %s16, 0
    %p81 = por %p79, %p80
    %p82 = scmp.ne.s32.totalorder %s68, %s69
    %p83 = scmp.eq.s32.totalorder %s17, 3
    %p84 = por %p82, %p83
    %p86 = scmp.ne.s32.totalorder %s69, %s85
    %p87 = scmp.eq.s32.totalorder %s17, 0
    %p88 = por %p86, %p87
    %s90 = sadd.s32 %s89, 1
    %p93 = scmp.eq.s32.totalorder %s11, 3
    %p94 = scmp.ne.s32.totalorder %s89, %s91
    %p95 = scmp.eq.s32.totalorder %s11, 0
    %p96 = por %p94, %p95
    %p97 = scmp.ne.s32.totalorder %s89, %s91
    %p98 = scmp.eq.s32.totalorder %s16, 3
    %p99 = por %p97, %p98
    %p100 = scmp.ne.s32.totalorder %s91, %s92
    %p101 = scmp.eq.s32.totalorder %s16, 0
    %p102 = por %p100, %p101
    %p103 = scmp.ne.s32.totalorder %s91, %s92
    %p104 = scmp.eq.s32.totalorder %s17, 3
    %p105 = por %p103, %p104
    %p107 = scmp.ne.s32.totalorder %s92, %s106
    %p108 = scmp.eq.s32.totalorder %s17, 0
    %p109 = por %p107, %p108
    %s110 = ssub.s32 %s18, %s30
    %s111 = ssub.s32 %s19, %s26
    %s112 = sor.u32 %s110, %s111
    %p113 = scmp.eq.s32.totalorder %s112, 0
    %s115 = sadd.s32 %s114, 1
    %s116 = scalar_select %p113, %s114, %s115
    %p119 = pneg %p113
    %p120 = scmp.eq.s32.totalorder %s11, 3
    %p121 = por %p119, %p120
    %p122 = scmp.ne.s32.totalorder %s114, %s117
    %p123 = scmp.eq.s32.totalorder %s11, 0
    %p124 = por %p122, %p123
    %p125 = scmp.ne.s32.totalorder %s114, %s117
    %p126 = scmp.eq.s32.totalorder %s16, 3
    %p127 = por %p125, %p126
    %p128 = scmp.ne.s32.totalorder %s117, %s118
    %p129 = scmp.eq.s32.totalorder %s16, 0
    %p130 = por %p128, %p129
    %p131 = scmp.ne.s32.totalorder %s117, %s118
    %p132 = scmp.eq.s32.totalorder %s17, 3
    %p133 = por %p131, %p132
    %p135 = scmp.ne.s32.totalorder %s118, %s134
    %p136 = scmp.eq.s32.totalorder %s17, 0
    %p137 = por %p135, %p136
    %s138 = ssub.s32 %s18, %s30
    %s139 = ssub.s32 %s19, %s26
    %s140 = sor.u32 %s138, %s139
    %p141 = scmp.eq.s32.totalorder %s140, 0
    %s143 = sadd.s32 %s142, 1
    %s144 = scalar_select %p141, %s142, %s143
    %p147 = pneg %p141
    %p148 = scmp.eq.s32.totalorder %s11, 3
    %p149 = por %p147, %p148
    %p150 = scmp.ne.s32.totalorder %s142, %s145
    %p151 = scmp.eq.s32.totalorder %s11, 0
    %p152 = por %p150, %p151
    %p153 = scmp.ne.s32.totalorder %s142, %s145
    %p154 = scmp.eq.s32.totalorder %s16, 3
    %p155 = por %p153, %p154
    %p156 = scmp.ne.s32.totalorder %s145, %s146
    %p157 = scmp.eq.s32.totalorder %s16, 0
    %p158 = por %p156, %p157
    %p159 = scmp.ne.s32.totalorder %s145, %s146
    %p160 = scmp.eq.s32.totalorder %s17, 3
    %p161 = por %p159, %p160
    %p163 = scmp.ne.s32.totalorder %s146, %s162
    %p164 = scmp.eq.s32.totalorder %s17, 0
    %p165 = por %p163, %p164
    %p166 = scmp.le.s32.totalorder 1, %s11
    %p167 = scmp.lt.s32.totalorder %s11, 5
    %p168 = pnand %p166, %p167
    %p169 = pneg %p168
    // Predicated region
    $region9: #{up_forward.4} parent=5 // pred_check
      _
    $region10: #{up_forward.4} parent=5 // pred_check_branch
      %171 = sbr.rel (%p168) target = $region12
    $region11: #{up_forward.4} parent=5 // pred_region
      %s172 = ssub.s32 %s11, 1
      // Predicated region
      $region13: #{up_forward.4} parent=11 // pred_check
        %p173 = pneg %p102
      $region14: #{up_forward.4} parent=11 // pred_check_branch
        %175 = sbr.rel (%p173) target = $region16
      $region15: #{up_forward.4} parent=11 // pred_region
        _
      $region16: #{up_forward.4} parent=11 // pred_fallthru
        _
    $region12: #{up_forward.4} parent=5 // pred_fallthru
      _
    %p176 = scmp.lt.s32.totalorder %s11, 4
    // Predicated region
    $region17: #{up_forward.4} parent=5 // pred_check
      %p177 = pneg %p176
    $region18: #{up_forward.4} parent=5 // pred_check_branch
      %179 = sbr.rel (%p177) target = $region20
    $region19: #{up_forward.4} parent=5 // pred_region
      // Predicated region
      $region21: #{up_forward.4} parent=19 // pred_check
        %p180 = pneg %p45
      $region22: #{up_forward.4} parent=19 // pred_check_branch
        %182 = sbr.rel (%p180) target = $region24
      $region23: #{up_forward.4} parent=19 // pred_region
        %s183 = smul.u32 8, %s19
        %p184 = scmp.lt.s32.totalorder %s18, 1
        %s185 = scalar_select %p184, %s18, 1
        %p186 = scmp.lt.s32.totalorder %s183, 23
        %s187 = scalar_select %p186, %s183, 23
        %s188 = smul.addr %s187, 3
        %s189 = smul.addr %s185, 72
        %s190 = sadd.s32 %s188, %s189
        %s191 = smul.addr %s190, 4
        %s192 = scalar_lea.vmem %s0, %s191
        %s193 = smul.u32 8, %s19
      $region24: #{up_forward.4} parent=19 // pred_fallthru
        _
      // Predicated region
      $region25: #{up_forward.4} parent=19 // pred_check
        %p194 = pneg %p75
      $region26: #{up_forward.4} parent=19 // pred_check_branch
        %196 = sbr.rel (%p194) target = $region28
      $region27: #{up_forward.4} parent=19 // pred_region
        %s197 = sadd.s32 %s19, 1
        %s198 = smul.u32 8, %s197
        %p199 = scmp.lt.s32.totalorder %s18, 1
        %s200 = scalar_select %p199, %s18, 1
        %p201 = scmp.lt.s32.totalorder %s198, 23
        %s202 = scalar_select %p201, %s198, 23
        %s203 = smul.addr %s202, 3
        %s204 = smul.addr %s200, 72
        %s205 = sadd.s32 %s203, %s204
        %s206 = smul.addr %s205, 4
        %s207 = scalar_lea.vmem %s1, %s206
        %s208 = sadd.s32 %s19, 1
        %s209 = smul.u32 8, %s208
      $region28: #{up_forward.4} parent=19 // pred_fallthru
        _
    $region20: #{up_forward.4} parent=5 // pred_fallthru
      _
    %p210 = scmp.le.s32.totalorder 1, %s11
    %p211 = scmp.lt.s32.totalorder %s11, 5
    %p212 = pnand %p210, %p211
    %p213 = pneg %p212
    // Predicated region
    $region29: #{up_forward.4} parent=5 // pred_check
      _
    $region30: #{up_forward.4} parent=5 // pred_check_branch
      %215 = sbr.rel (%p212) target = $region32
    $region31: #{up_forward.4} parent=5 // pred_region
      %s216 = ssub.s32 %s11, 1
      %s217 = smul.u32 8, %s21
      %p218 = scmp.lt.s32.totalorder %s20, 1
      %s219 = scalar_select %p218, %s20, 1
      %p220 = scmp.lt.s32.totalorder %s217, 23
      %s221 = scalar_select %p220, %s217, 23
      %s222 = smul.addr %s221, 3
      %s223 = smul.addr %s219, 72
      %s224 = sadd.s32 %s222, %s223
      %s225 = smul.addr %s224, 4
      %s226 = scalar_lea.vmem %s0, %s225
      %p227 = pneg %p51
      %p228 = pneg %p48
      %s229 = sadd.s32 %s21, 1
      %s230 = smul.u32 8, %s229
      %p231 = scmp.lt.s32.totalorder %s20, 1
      %s232 = scalar_select %p231, %s20, 1
      %p233 = scmp.lt.s32.totalorder %s230, 23
      %s234 = scalar_select %p233, %s230, 23
      %s235 = smul.addr %s234, 3
      %s236 = smul.addr %s232, 72
      %s237 = sadd.s32 %s235, %s236
      %s238 = smul.addr %s237, 4
      %s239 = scalar_lea.vmem %s1, %s238
      %p240 = pneg %p81
      %p241 = pneg %p78
      %p242 = pneg %p102
      %p243 = pneg %p99
      %p244 = pneg %p130
      %p245 = pneg %p127
      %s246 = smul.u32 8, %s21
      %p247 = scmp.lt.s32.totalorder %s20, 1
      %s248 = scalar_select %p247, %s20, 1
      %p249 = scmp.lt.s32.totalorder %s246, 15
      %s250 = scalar_select %p249, %s246, 15
      %s251 = smul.addr %s250, 2
      %s252 = smul.addr %s248, 32
      %s253 = sadd.s32 %s251, %s252
      %s254 = smul.addr %s253, 8
      %s255 = scalar_lea.vmem %s3, %s254
      %p256 = pneg %p158
      %p257 = pneg %p155
      %p258 = scmp.lt.s32.totalorder %s20, 1
      %s259 = scalar_select %p258, %s20, 1
      %p260 = scmp.lt.s32.totalorder %s21, 1
      %s261 = scalar_select %p260, %s21, 1
      %s262 = smul.addr %s259, 2
      %s263 = sadd.s32 %s261, %s262
      %s264 = smul.addr %s263, 8
      %s265 = scalar_lea.vmem %s4, %s264
      %s266 = smul.u32 8, %s21
      %p267 = scmp.lt.s32.totalorder %s20, 1
      %s268 = scalar_select %p267, %s20, 1
      %p269 = scmp.lt.s32.totalorder %s266, 23
      %s270 = scalar_select %p269, %s266, 23
      %s271 = smul.addr %s270, 3
      %s272 = smul.addr %s268, 72
      %s273 = sadd.s32 %s271, %s272
      %s274 = smul.addr %s273, 4
      %s275 = scalar_lea.vmem %s0, %s274
      %s276 = smul.u32 8, %s21
      %s277 = sadd.s32 %s21, 1
      %s278 = smul.u32 8, %s277
      %p279 = scmp.lt.s32.totalorder %s20, 1
      %s280 = scalar_select %p279, %s20, 1
      %p281 = scmp.lt.s32.totalorder %s278, 23
      %s282 = scalar_select %p281, %s278, 23
      %s283 = smul.addr %s282, 3
      %s284 = smul.addr %s280, 72
      %s285 = sadd.s32 %s283, %s284
      %s286 = smul.addr %s285, 4
      %s287 = scalar_lea.vmem %s1, %s286
      %s288 = sadd.s32 %s21, 1
      %s289 = smul.u32 8, %s288
      %s290 = smul.u32 8, %s21
      %p291 = scmp.lt.s32.totalorder %s20, 1
      %s292 = scalar_select %p291, %s20, 1
      %p293 = scmp.lt.s32.totalorder %s290, 15
      %s294 = scalar_select %p293, %s290, 15
      %s295 = smul.addr %s294, 2
      %s296 = smul.addr %s292, 32
      %s297 = sadd.s32 %s295, %s296
      %s298 = smul.addr %s297, 8
      %s299 = scalar_lea.vmem %s3, %s298
      %s300 = smul.u32 8, %s21
      %p301 = scmp.lt.s32.totalorder %s20, 1
      %s302 = scalar_select %p301, %s20, 1
      %p303 = scmp.lt.s32.totalorder %s21, 1
      %s304 = scalar_select %p303, %s21, 1
      %s305 = smul.addr %s302, 2
      %s306 = sadd.s32 %s304, %s305
      %s307 = smul.addr %s306, 8
      %s308 = scalar_lea.vmem %s4, %s307
      %v309 = vld [vmem:[%s275] sm:$0xf]
      %v310 = vld [vmem:[%s275 + $0x4] sm:$0xf]
      %v311 = vld [vmem:[%s275 + $0x8] sm:$0x1]
      %v312 = vld [vmem:[%s275 + $0xc] sm:$0xf]
      %v313 = vld [vmem:[%s275 + $0x10] sm:$0xf]
      %v314 = vld [vmem:[%s275 + $0x14] sm:$0x1]
      %v315 = vld [vmem:[%s275 + $0x18] sm:$0xf]
      %v316 = vld [vmem:[%s275 + $0x1c] sm:$0xf]
      %v317 = vld [vmem:[%s275 + $0x20] sm:$0x1]
      %v318 = vld [vmem:[%s275 + $0x24] sm:$0xf]
      %v319 = vld [vmem:[%s275 + $0x28] sm:$0xf]
      %v320 = vld [vmem:[%s275 + $0x2c] sm:$0x1]
      %v321 = vld [vmem:[%s275 + $0x30] sm:$0xf]
      %v322 = vld [vmem:[%s275 + $0x34] sm:$0xf]
      %v323 = vld [vmem:[%s275 + $0x38] sm:$0x1]
      %v324 = vld [vmem:[%s275 + $0x3c] sm:$0xf]
      %v325 = vld [vmem:[%s275 + $0x40] sm:$0xf]
      %v326 = vld [vmem:[%s275 + $0x44] sm:$0x1]
      %v327 = vld [vmem:[%s275 + $0x48] sm:$0xf]
      %v328 = vld [vmem:[%s275 + $0x4c] sm:$0xf]
      %v329 = vld [vmem:[%s275 + $0x50] sm:$0x1]
      %v330 = vld [vmem:[%s275 + $0x54] sm:$0xf]
      %v331 = vld [vmem:[%s275 + $0x58] sm:$0xf]
      %v332 = vld [vmem:[%s275 + $0x5c] sm:$0x1]
      %v333 = vld [vmem:[%s287] sm:$0xf]
      %v334 = vld [vmem:[%s287 + $0x4] sm:$0xf]
      %v335 = vld [vmem:[%s287 + $0x8] sm:$0x1]
      %v336 = vld [vmem:[%s287 + $0xc] sm:$0xf]
      %v337 = vld [vmem:[%s287 + $0x10] sm:$0xf]
      %v338 = vld [vmem:[%s287 + $0x14] sm:$0x1]
      %v355 = vunpack.c.l.b16 %v309
      %v356 = vunpack.c.l.b16 %v310
      %v357 = vunpack.c.l.b16 %v312
      %v358 = vunpack.c.l.b16 %v313
      %v359 = vunpack.c.l.b16 %v315
      %v360 = vunpack.c.l.b16 %v316
      %v361 = vunpack.c.l.b16 %v318
      %v362 = vunpack.c.l.b16 %v319
      %v363 = vunpack.c.l.b16 %v321
      %v364 = vunpack.c.l.b16 %v322
      %v365 = vunpack.c.l.b16 %v324
      %v366 = vunpack.c.l.b16 %v325
      %v367 = vunpack.c.l.b16 %v327
      %v368 = vunpack.c.l.b16 %v328
      %v369 = vunpack.c.l.b16 %v330
      %v370 = vunpack.c.l.b16 %v331
      %v371 = vpack.c.b16 %v356, %v355
      %v372 = vpack.c.b16 %v358, %v357
      %v373 = vpack.c.b16 %v360, %v359
      %v374 = vpack.c.b16 %v362, %v361
      %v375 = vpack.c.b16 %v364, %v363
      %v376 = vpack.c.b16 %v366, %v365
      %v377 = vpack.c.b16 %v368, %v367
      %v378 = vpack.c.b16 %v370, %v369
      %v395 = vunpack.c.l.b16 %v311
      %v396 = vunpack.c.l.b16 %v314
      %v397 = vunpack.c.l.b16 %v317
      %v398 = vunpack.c.l.b16 %v320
      %v399 = vunpack.c.l.b16 %v323
      %v400 = vunpack.c.l.b16 %v326
      %v401 = vunpack.c.l.b16 %v329
      %v402 = vunpack.c.l.b16 %v332
      %v403 = vpack.c.b16 %v395, %v395
      %v404 = vpack.c.b16 %v396, %v396
      %v405 = vpack.c.b16 %v397, %v397
      %v406 = vpack.c.b16 %v398, %v398
      %v407 = vpack.c.b16 %v399, %v399
      %v408 = vpack.c.b16 %v400, %v400
      %v409 = vpack.c.b16 %v401, %v401
      %v410 = vpack.c.b16 %v402, %v402
      %vm411 = vsmask.f32 7424
      %v413 = vshrl.u32 %v371, 16
      %v415 = vshll.u32 %v371, 16
      %v417 = vrot.slane %v415, 1
      %v418 = vor.u32 %v413, %v417
      %v420 = vshll.u32 %v403, 16
      %v422 = vrot.slane %v420, 1
      %v423 = vsel %vm411, %v418, %v422
      %v425 = vshrl.u32 %v372, 16
      %v427 = vshll.u32 %v372, 16
      %v429 = vrot.slane %v427, 1
      %v430 = vor.u32 %v425, %v429
      %v432 = vshll.u32 %v404, 16
      %v434 = vrot.slane %v432, 1
      %v435 = vsel %vm411, %v430, %v434
      %v437 = vshrl.u32 %v373, 16
      %v439 = vshll.u32 %v373, 16
      %v441 = vrot.slane %v439, 1
      %v442 = vor.u32 %v437, %v441
      %v444 = vshll.u32 %v405, 16
      %v446 = vrot.slane %v444, 1
      %v447 = vsel %vm411, %v442, %v446
      %v449 = vshrl.u32 %v374, 16
      %v451 = vshll.u32 %v374, 16
      %v453 = vrot.slane %v451, 1
      %v454 = vor.u32 %v449, %v453
      %v456 = vshll.u32 %v406, 16
      %v458 = vrot.slane %v456, 1
      %v459 = vsel %vm411, %v454, %v458
      %v461 = vshrl.u32 %v375, 16
      %v463 = vshll.u32 %v375, 16
      %v465 = vrot.slane %v463, 1
      %v466 = vor.u32 %v461, %v465
      %v468 = vshll.u32 %v407, 16
      %v470 = vrot.slane %v468, 1
      %v471 = vsel %vm411, %v466, %v470
      %v473 = vshrl.u32 %v376, 16
      %v475 = vshll.u32 %v376, 16
      %v477 = vrot.slane %v475, 1
      %v478 = vor.u32 %v473, %v477
      %v480 = vshll.u32 %v408, 16
      %v482 = vrot.slane %v480, 1
      %v483 = vsel %vm411, %v478, %v482
      %v485 = vshrl.u32 %v377, 16
      %v487 = vshll.u32 %v377, 16
      %v489 = vrot.slane %v487, 1
      %v490 = vor.u32 %v485, %v489
      %v492 = vshll.u32 %v409, 16
      %v494 = vrot.slane %v492, 1
      %v495 = vsel %vm411, %v490, %v494
      %v497 = vshrl.u32 %v378, 16
      %v499 = vshll.u32 %v378, 16
      %v501 = vrot.slane %v499, 1
      %v502 = vor.u32 %v497, %v501
      %v504 = vshll.u32 %v410, 16
      %v506 = vrot.slane %v504, 1
      %v507 = vsel %vm411, %v502, %v506
      %vm516 = vcmask 1046528
      %v517 = vrot.slane %v371, 1
      %v518 = vrot.slane %v403, 1
      %v519 = vsel %vm516, %v517, %v518
      %v520 = vrot.slane %v372, 1
      %v521 = vrot.slane %v404, 1
      %v522 = vsel %vm516, %v520, %v521
      %v523 = vrot.slane %v373, 1
      %v524 = vrot.slane %v405, 1
      %v525 = vsel %vm516, %v523, %v524
      %v526 = vrot.slane %v374, 1
      %v527 = vrot.slane %v406, 1
      %v528 = vsel %vm516, %v526, %v527
      %v529 = vrot.slane %v375, 1
      %v530 = vrot.slane %v407, 1
      %v531 = vsel %vm516, %v529, %v530
      %v532 = vrot.slane %v376, 1
      %v533 = vrot.slane %v408, 1
      %v534 = vsel %vm516, %v532, %v533
      %v535 = vrot.slane %v377, 1
      %v536 = vrot.slane %v409, 1
      %v537 = vsel %vm516, %v535, %v536
      %v538 = vrot.slane %v378, 1
      %v539 = vrot.slane %v410, 1
      %v540 = vsel %vm516, %v538, %v539
      %v551 = vunpack.c.l.b16 %v333
      %v552 = vunpack.c.l.b16 %v334
      %v553 = vpack.c.b16 %v552, %v551
      %v556 = vunpack.c.l.b16 %v335
      %v557 = vpack.c.b16 %v556, %v556
      %v559 = vshrl.u32 %v553, 16
      %v561 = vshll.u32 %v553, 16
      %v563 = vrot.slane %v561, 1
      %v564 = vor.u32 %v559, %v563
      %v566 = vshll.u32 %v557, 16
      %v568 = vrot.slane %v566, 1
      %v569 = vsel %vm411, %v564, %v568
      %v571 = vrot.slane %v553, 1
      %v572 = vrot.slane %v557, 1
      %v573 = vsel %vm516, %v571, %v572
      %v577 = vunpack.c.l.b16 %v336
      %v578 = vunpack.c.l.b16 %v337
      %v579 = vpack.c.b16 %v578, %v577
      %v582 = vunpack.c.l.b16 %v338
      %v583 = vpack.c.b16 %v582, %v582
      %v585 = vshrl.u32 %v579, 16
      %v587 = vshll.u32 %v579, 16
      %v589 = vrot.slane %v587, 1
      %v590 = vor.u32 %v585, %v589
      %v592 = vshll.u32 %v583, 16
      %v594 = vrot.slane %v592, 1
      %v595 = vsel %vm411, %v590, %v594
      %v597 = vrot.slane %v579, 1
      %v598 = vrot.slane %v583, 1
      %v599 = vsel %vm516, %v597, %v598
      %v601 = vld [vmem:[%s2] sm:$0xf]
      %v602 = vld [vmem:[%s2 + $0x4] sm:$0xf]
      %v603 = vld [vmem:[%s2 + $0x8] sm:$0xf]
      %v604 = vld [vmem:[%s2 + $0xc] sm:$0xf]
      %v605 = vld [vmem:[%s2 + $0x10] sm:$0xf]
      %v606 = vld [vmem:[%s2 + $0x14] sm:$0xf]
      %v607 = vld [vmem:[%s2 + $0x18] sm:$0xf]
      %v608 = vld [vmem:[%s2 + $0x1c] sm:$0xf]
      %v609 = vld [vmem:[%s2 + $0x20] sm:$0xf]
      %v610 = vld [vmem:[%s2 + $0x24] sm:$0xf]
      %v611 = vld [vmem:[%s2 + $0x28] sm:$0xf]
      %v612 = vld [vmem:[%s2 + $0x2c] sm:$0xf]
      %v613 = vld [vmem:[%s2 + $0x30] sm:$0xf]
      %v614 = vld [vmem:[%s2 + $0x34] sm:$0xf]
      %v615 = vld [vmem:[%s2 + $0x38] sm:$0xf]
      %v616 = vld [vmem:[%s2 + $0x3c] sm:$0xf]
      %v617 = vld [vmem:[%s2 + $0x40] sm:$0xf]
      %v618 = vld [vmem:[%s2 + $0x44] sm:$0xf]
      %v619 = vld [vmem:[%s2 + $0x48] sm:$0xf]
      %v620 = vld [vmem:[%s2 + $0x4c] sm:$0xf]
      %v621 = vld [vmem:[%s2 + $0x50] sm:$0xf]
      %v622 = vld [vmem:[%s2 + $0x54] sm:$0xf]
      %v623 = vld [vmem:[%s2 + $0x58] sm:$0xf]
      %v624 = vld [vmem:[%s2 + $0x5c] sm:$0xf]
      %v625 = vld [vmem:[%s2 + $0x60] sm:$0xf]
      %v626 = vld [vmem:[%s2 + $0x64] sm:$0xf]
      %v627 = vld [vmem:[%s2 + $0x68] sm:$0xf]
      %v628 = vld [vmem:[%s2 + $0x6c] sm:$0xf]
      %v629 = vld [vmem:[%s2 + $0x70] sm:$0xf]
      %v630 = vld [vmem:[%s2 + $0x74] sm:$0xf]
      %v631 = vld [vmem:[%s2 + $0x78] sm:$0xf]
      %v632 = vld [vmem:[%s2 + $0x7c] sm:$0xf]
      %v633 = vld [vmem:[%s2 + $0x80] sm:$0xf]
      %v634 = vld [vmem:[%s2 + $0x84] sm:$0xf]
      %v635 = vld [vmem:[%s2 + $0x88] sm:$0xf]
      %v636 = vld [vmem:[%s2 + $0x8c] sm:$0xf]
      %v637 = vld [vmem:[%s2 + $0x90] sm:$0xf]
      %v638 = vld [vmem:[%s2 + $0x94] sm:$0xf]
      %v639 = vld [vmem:[%s2 + $0x98] sm:$0xf]
      %v640 = vld [vmem:[%s2 + $0x9c] sm:$0xf]
      %v641 = vld [vmem:[%s2 + $0xa0] sm:$0xf]
      %v642 = vld [vmem:[%s2 + $0xa4] sm:$0xf]
      %v643 = vld [vmem:[%s2 + $0xa8] sm:$0xf]
      %v644 = vld [vmem:[%s2 + $0xac] sm:$0xf]
      %v645 = vld [vmem:[%s2 + $0xb0] sm:$0xf]
      %v646 = vld [vmem:[%s2 + $0xb4] sm:$0xf]
      %v647 = vld [vmem:[%s2 + $0xb8] sm:$0xf]
      %v648 = vld [vmem:[%s2 + $0xbc] sm:$0xf]
      %v649 = vld [vmem:[%s2 + $0xc0] sm:$0xf]
      %v650 = vld [vmem:[%s2 + $0xc4] sm:$0xf]
      %v651 = vld [vmem:[%s2 + $0xc8] sm:$0xf]
      %v652 = vld [vmem:[%s2 + $0xcc] sm:$0xf]
      %v653 = vld [vmem:[%s2 + $0xd0] sm:$0xf]
      %v654 = vld [vmem:[%s2 + $0xd4] sm:$0xf]
      %v655 = vld [vmem:[%s2 + $0xd8] sm:$0xf]
      %v656 = vld [vmem:[%s2 + $0xdc] sm:$0xf]
      %v657 = vld [vmem:[%s2 + $0xe0] sm:$0xf]
      %v658 = vld [vmem:[%s2 + $0xe4] sm:$0xf]
      %v659 = vld [vmem:[%s2 + $0xe8] sm:$0xf]
      %v660 = vld [vmem:[%s2 + $0xec] sm:$0xf]
      %v661 = vld [vmem:[%s2 + $0xf0] sm:$0xf]
      %v662 = vld [vmem:[%s2 + $0xf4] sm:$0xf]
      %v663 = vld [vmem:[%s2 + $0xf8] sm:$0xf]
      %v664 = vld [vmem:[%s2 + $0xfc] sm:$0xf]
      %v665 = vld [vmem:[%s2 + $0x100] sm:$0xf]
      %v666 = vld [vmem:[%s2 + $0x104] sm:$0xf]
      %v667 = vld [vmem:[%s2 + $0x108] sm:$0xf]
      %v668 = vld [vmem:[%s2 + $0x10c] sm:$0xf]
      %v669 = vld [vmem:[%s2 + $0x110] sm:$0xf]
      %v670 = vld [vmem:[%s2 + $0x114] sm:$0xf]
      %v671 = vld [vmem:[%s2 + $0x118] sm:$0xf]
      %v672 = vld [vmem:[%s2 + $0x11c] sm:$0xf]
      %v673 = vld [vmem:[%s2 + $0x120] sm:$0xf]
      %v674 = vld [vmem:[%s2 + $0x124] sm:$0xf]
      %v675 = vld [vmem:[%s2 + $0x128] sm:$0xf]
      %v676 = vld [vmem:[%s2 + $0x12c] sm:$0xf]
      %v677 = vld [vmem:[%s2 + $0x130] sm:$0xf]
      %v678 = vld [vmem:[%s2 + $0x134] sm:$0xf]
      %v679 = vld [vmem:[%s2 + $0x138] sm:$0xf]
      %v680 = vld [vmem:[%s2 + $0x13c] sm:$0xf]
      %v681 = vld [vmem:[%s2 + $0x140] sm:$0xf]
      %v682 = vld [vmem:[%s2 + $0x144] sm:$0xf]
      %v683 = vld [vmem:[%s2 + $0x148] sm:$0xf]
      %v684 = vld [vmem:[%s2 + $0x14c] sm:$0xf]
      %v685 = vld [vmem:[%s2 + $0x150] sm:$0xf]
      %v686 = vld [vmem:[%s2 + $0x154] sm:$0xf]
      %v687 = vld [vmem:[%s2 + $0x158] sm:$0xf]
      %v688 = vld [vmem:[%s2 + $0x15c] sm:$0xf]
      %v689 = vld [vmem:[%s2 + $0x160] sm:$0xf]
      %v690 = vld [vmem:[%s2 + $0x164] sm:$0xf]
      %v691 = vld [vmem:[%s2 + $0x168] sm:$0xf]
      %v692 = vld [vmem:[%s2 + $0x16c] sm:$0xf]
      %v693 = vld [vmem:[%s2 + $0x170] sm:$0xf]
      %v694 = vld [vmem:[%s2 + $0x174] sm:$0xf]
      %v695 = vld [vmem:[%s2 + $0x178] sm:$0xf]
      %v696 = vld [vmem:[%s2 + $0x17c] sm:$0xf]
      %v697 = vld [vmem:[%s2 + $0x180] sm:$0xf]
      %v698 = vld [vmem:[%s2 + $0x184] sm:$0xf]
      %v699 = vld [vmem:[%s2 + $0x188] sm:$0xf]
      %v700 = vld [vmem:[%s2 + $0x18c] sm:$0xf]
      %v701 = vld [vmem:[%s2 + $0x190] sm:$0xf]
      %v702 = vld [vmem:[%s2 + $0x194] sm:$0xf]
      %v703 = vld [vmem:[%s2 + $0x198] sm:$0xf]
      %v704 = vld [vmem:[%s2 + $0x19c] sm:$0xf]
      %v705 = vld [vmem:[%s2 + $0x1a0] sm:$0xf]
      %v706 = vld [vmem:[%s2 + $0x1a4] sm:$0xf]
      %v707 = vld [vmem:[%s2 + $0x1a8] sm:$0xf]
      %v708 = vld [vmem:[%s2 + $0x1ac] sm:$0xf]
      %v709 = vld [vmem:[%s2 + $0x1b0] sm:$0xf]
      %v710 = vld [vmem:[%s2 + $0x1b4] sm:$0xf]
      %v711 = vld [vmem:[%s2 + $0x1b8] sm:$0xf]
      %v712 = vld [vmem:[%s2 + $0x1bc] sm:$0xf]
      %v713 = vld [vmem:[%s2 + $0x1c0] sm:$0xf]
      %v714 = vld [vmem:[%s2 + $0x1c4] sm:$0xf]
      %v715 = vld [vmem:[%s2 + $0x1c8] sm:$0xf]
      %v716 = vld [vmem:[%s2 + $0x1cc] sm:$0xf]
      %v717 = vld [vmem:[%s2 + $0x1d0] sm:$0xf]
      %v718 = vld [vmem:[%s2 + $0x1d4] sm:$0xf]
      %v719 = vld [vmem:[%s2 + $0x1d8] sm:$0xf]
      %v720 = vld [vmem:[%s2 + $0x1dc] sm:$0xf]
      %v721 = vld [vmem:[%s2 + $0x1e0] sm:$0xf]
      %v722 = vld [vmem:[%s2 + $0x1e4] sm:$0xf]
      %v723 = vld [vmem:[%s2 + $0x1e8] sm:$0xf]
      %v724 = vld [vmem:[%s2 + $0x1ec] sm:$0xf]
      %v725 = vld [vmem:[%s2 + $0x1f0] sm:$0xf]
      %v726 = vld [vmem:[%s2 + $0x1f4] sm:$0xf]
      %v727 = vld [vmem:[%s2 + $0x1f8] sm:$0xf]
      %v728 = vld [vmem:[%s2 + $0x1fc] sm:$0xf]
      %v729 = vld [vmem:[%s2 + $0x200] sm:$0xf]
      %v730 = vld [vmem:[%s2 + $0x204] sm:$0xf]
      %v731 = vld [vmem:[%s2 + $0x208] sm:$0xf]
      %v732 = vld [vmem:[%s2 + $0x20c] sm:$0xf]
      %v733 = vld [vmem:[%s2 + $0x210] sm:$0xf]
      %v734 = vld [vmem:[%s2 + $0x214] sm:$0xf]
      %v735 = vld [vmem:[%s2 + $0x218] sm:$0xf]
      %v736 = vld [vmem:[%s2 + $0x21c] sm:$0xf]
      %v737 = vld [vmem:[%s2 + $0x220] sm:$0xf]
      %v738 = vld [vmem:[%s2 + $0x224] sm:$0xf]
      %v739 = vld [vmem:[%s2 + $0x228] sm:$0xf]
      %v740 = vld [vmem:[%s2 + $0x22c] sm:$0xf]
      %v741 = vld [vmem:[%s2 + $0x230] sm:$0xf]
      %v742 = vld [vmem:[%s2 + $0x234] sm:$0xf]
      %v743 = vld [vmem:[%s2 + $0x238] sm:$0xf]
      %v744 = vld [vmem:[%s2 + $0x23c] sm:$0xf]
      %v889 = vunpack.c.l.b16 %v601
      %v890 = vunpack.c.l.b16 %v602
      %v891 = vunpack.c.l.b16 %v603
      %v892 = vunpack.c.l.b16 %v604
      %v893 = vunpack.c.l.b16 %v605
      %v894 = vunpack.c.l.b16 %v606
      %v895 = vunpack.c.l.b16 %v607
      %v896 = vunpack.c.l.b16 %v608
      %v897 = vunpack.c.l.b16 %v609
      %v898 = vunpack.c.l.b16 %v610
      %v899 = vunpack.c.l.b16 %v611
      %v900 = vunpack.c.l.b16 %v612
      %v901 = vunpack.c.l.b16 %v613
      %v902 = vunpack.c.l.b16 %v614
      %v903 = vunpack.c.l.b16 %v615
      %v904 = vunpack.c.l.b16 %v616
      %v905 = vunpack.c.l.b16 %v617
      %v906 = vunpack.c.l.b16 %v618
      %v907 = vunpack.c.l.b16 %v619
      %v908 = vunpack.c.l.b16 %v620
      %v909 = vunpack.c.l.b16 %v621
      %v910 = vunpack.c.l.b16 %v622
      %v911 = vunpack.c.l.b16 %v623
      %v912 = vunpack.c.l.b16 %v624
      %v913 = vunpack.c.l.b16 %v625
      %v914 = vunpack.c.l.b16 %v626
      %v915 = vunpack.c.l.b16 %v627
      %v916 = vunpack.c.l.b16 %v628
      %v917 = vunpack.c.l.b16 %v629
      %v918 = vunpack.c.l.b16 %v630
      %v919 = vunpack.c.l.b16 %v631
      %v920 = vunpack.c.l.b16 %v632
      %v921 = vunpack.c.l.b16 %v633
      %v922 = vunpack.c.l.b16 %v634
      %v923 = vunpack.c.l.b16 %v635
      %v924 = vunpack.c.l.b16 %v636
      %v925 = vunpack.c.l.b16 %v637
      %v926 = vunpack.c.l.b16 %v638
      %v927 = vunpack.c.l.b16 %v639
      %v928 = vunpack.c.l.b16 %v640
      %v929 = vunpack.c.l.b16 %v641
      %v930 = vunpack.c.l.b16 %v642
      %v931 = vunpack.c.l.b16 %v643
      %v932 = vunpack.c.l.b16 %v644
      %v933 = vunpack.c.l.b16 %v645
      %v934 = vunpack.c.l.b16 %v646
      %v935 = vunpack.c.l.b16 %v647
      %v936 = vunpack.c.l.b16 %v648
      %v937 = vunpack.c.l.b16 %v649
      %v938 = vunpack.c.l.b16 %v650
      %v939 = vunpack.c.l.b16 %v651
      %v940 = vunpack.c.l.b16 %v652
      %v941 = vunpack.c.l.b16 %v653
      %v942 = vunpack.c.l.b16 %v654
      %v943 = vunpack.c.l.b16 %v655
      %v944 = vunpack.c.l.b16 %v656
      %v945 = vunpack.c.l.b16 %v657
      %v946 = vunpack.c.l.b16 %v658
      %v947 = vunpack.c.l.b16 %v659
      %v948 = vunpack.c.l.b16 %v660
      %v949 = vunpack.c.l.b16 %v661
      %v950 = vunpack.c.l.b16 %v662
      %v951 = vunpack.c.l.b16 %v663
      %v952 = vunpack.c.l.b16 %v664
      %v953 = vunpack.c.l.b16 %v665
      %v954 = vunpack.c.l.b16 %v666
      %v955 = vunpack.c.l.b16 %v667
      %v956 = vunpack.c.l.b16 %v668
      %v957 = vunpack.c.l.b16 %v669
      %v958 = vunpack.c.l.b16 %v670
      %v959 = vunpack.c.l.b16 %v671
      %v960 = vunpack.c.l.b16 %v672
      %v961 = vunpack.c.l.b16 %v673
      %v962 = vunpack.c.l.b16 %v674
      %v963 = vunpack.c.l.b16 %v675
      %v964 = vunpack.c.l.b16 %v676
      %v965 = vunpack.c.l.b16 %v677
      %v966 = vunpack.c.l.b16 %v678
      %v967 = vunpack.c.l.b16 %v679
      %v968 = vunpack.c.l.b16 %v680
      %v969 = vunpack.c.l.b16 %v681
      %v970 = vunpack.c.l.b16 %v682
      %v971 = vunpack.c.l.b16 %v683
      %v972 = vunpack.c.l.b16 %v684
      %v973 = vunpack.c.l.b16 %v685
      %v974 = vunpack.c.l.b16 %v686
      %v975 = vunpack.c.l.b16 %v687
      %v976 = vunpack.c.l.b16 %v688
      %v977 = vunpack.c.l.b16 %v689
      %v978 = vunpack.c.l.b16 %v690
      %v979 = vunpack.c.l.b16 %v691
      %v980 = vunpack.c.l.b16 %v692
      %v981 = vunpack.c.l.b16 %v693
      %v982 = vunpack.c.l.b16 %v694
      %v983 = vunpack.c.l.b16 %v695
      %v984 = vunpack.c.l.b16 %v696
      %v985 = vunpack.c.l.b16 %v697
      %v986 = vunpack.c.l.b16 %v698
      %v987 = vunpack.c.l.b16 %v699
      %v988 = vunpack.c.l.b16 %v700
      %v989 = vunpack.c.l.b16 %v701
      %v990 = vunpack.c.l.b16 %v702
      %v991 = vunpack.c.l.b16 %v703
      %v992 = vunpack.c.l.b16 %v704
      %v993 = vunpack.c.l.b16 %v705
      %v994 = vunpack.c.l.b16 %v706
      %v995 = vunpack.c.l.b16 %v707
      %v996 = vunpack.c.l.b16 %v708
      %v997 = vunpack.c.l.b16 %v709
      %v998 = vunpack.c.l.b16 %v710
      %v999 = vunpack.c.l.b16 %v711
      %v1000 = vunpack.c.l.b16 %v712
      %v1001 = vunpack.c.l.b16 %v713
      %v1002 = vunpack.c.l.b16 %v714
      %v1003 = vunpack.c.l.b16 %v715
      %v1004 = vunpack.c.l.b16 %v716
      %v1005 = vunpack.c.l.b16 %v717
      %v1006 = vunpack.c.l.b16 %v718
      %v1007 = vunpack.c.l.b16 %v719
      %v1008 = vunpack.c.l.b16 %v720
      %v1009 = vunpack.c.l.b16 %v721
      %v1010 = vunpack.c.l.b16 %v722
      %v1011 = vunpack.c.l.b16 %v723
      %v1012 = vunpack.c.l.b16 %v724
      %v1013 = vunpack.c.l.b16 %v725
      %v1014 = vunpack.c.l.b16 %v726
      %v1015 = vunpack.c.l.b16 %v727
      %v1016 = vunpack.c.l.b16 %v728
      %v1017 = vunpack.c.l.b16 %v729
      %v1018 = vunpack.c.l.b16 %v730
      %v1019 = vunpack.c.l.b16 %v731
      %v1020 = vunpack.c.l.b16 %v732
      %v1021 = vunpack.c.l.b16 %v733
      %v1022 = vunpack.c.l.b16 %v734
      %v1023 = vunpack.c.l.b16 %v735
      %v1024 = vunpack.c.l.b16 %v736
      %v1025 = vunpack.c.l.b16 %v737
      %v1026 = vunpack.c.l.b16 %v738
      %v1027 = vunpack.c.l.b16 %v739
      %v1028 = vunpack.c.l.b16 %v740
      %v1029 = vunpack.c.l.b16 %v741
      %v1030 = vunpack.c.l.b16 %v742
      %v1031 = vunpack.c.l.b16 %v743
      %v1032 = vunpack.c.l.b16 %v744
      %v1033 = vpack.c.b16 %v890, %v889
      %v1034 = vpack.c.b16 %v892, %v891
      %v1035 = vpack.c.b16 %v894, %v893
      %v1036 = vpack.c.b16 %v896, %v895
      %v1037 = vpack.c.b16 %v898, %v897
      %v1038 = vpack.c.b16 %v900, %v899
      %v1039 = vpack.c.b16 %v902, %v901
      %v1040 = vpack.c.b16 %v904, %v903
      %v1041 = vpack.c.b16 %v906, %v905
      %v1042 = vpack.c.b16 %v908, %v907
      %v1043 = vpack.c.b16 %v910, %v909
      %v1044 = vpack.c.b16 %v912, %v911
      %v1045 = vpack.c.b16 %v914, %v913
      %v1046 = vpack.c.b16 %v916, %v915
      %v1047 = vpack.c.b16 %v918, %v917
      %v1048 = vpack.c.b16 %v920, %v919
      %v1049 = vpack.c.b16 %v922, %v921
      %v1050 = vpack.c.b16 %v924, %v923
      %v1051 = vpack.c.b16 %v926, %v925
      %v1052 = vpack.c.b16 %v928, %v927
      %v1053 = vpack.c.b16 %v930, %v929
      %v1054 = vpack.c.b16 %v932, %v931
      %v1055 = vpack.c.b16 %v934, %v933
      %v1056 = vpack.c.b16 %v936, %v935
      %v1057 = vpack.c.b16 %v938, %v937
      %v1058 = vpack.c.b16 %v940, %v939
      %v1059 = vpack.c.b16 %v942, %v941
      %v1060 = vpack.c.b16 %v944, %v943
      %v1061 = vpack.c.b16 %v946, %v945
      %v1062 = vpack.c.b16 %v948, %v947
      %v1063 = vpack.c.b16 %v950, %v949
      %v1064 = vpack.c.b16 %v952, %v951
      %v1065 = vpack.c.b16 %v954, %v953
      %v1066 = vpack.c.b16 %v956, %v955
      %v1067 = vpack.c.b16 %v958, %v957
      %v1068 = vpack.c.b16 %v960, %v959
      %v1069 = vpack.c.b16 %v962, %v961
      %v1070 = vpack.c.b16 %v964, %v963
      %v1071 = vpack.c.b16 %v966, %v965
      %v1072 = vpack.c.b16 %v968, %v967
      %v1073 = vpack.c.b16 %v970, %v969
      %v1074 = vpack.c.b16 %v972, %v971
      %v1075 = vpack.c.b16 %v974, %v973
      %v1076 = vpack.c.b16 %v976, %v975
      %v1077 = vpack.c.b16 %v978, %v977
      %v1078 = vpack.c.b16 %v980, %v979
      %v1079 = vpack.c.b16 %v982, %v981
      %v1080 = vpack.c.b16 %v984, %v983
      %v1081 = vpack.c.b16 %v986, %v985
      %v1082 = vpack.c.b16 %v988, %v987
      %v1083 = vpack.c.b16 %v990, %v989
      %v1084 = vpack.c.b16 %v992, %v991
      %v1085 = vpack.c.b16 %v994, %v993
      %v1086 = vpack.c.b16 %v996, %v995
      %v1087 = vpack.c.b16 %v998, %v997
      %v1088 = vpack.c.b16 %v1000, %v999
      %v1089 = vpack.c.b16 %v1002, %v1001
      %v1090 = vpack.c.b16 %v1004, %v1003
      %v1091 = vpack.c.b16 %v1006, %v1005
      %v1092 = vpack.c.b16 %v1008, %v1007
      %v1093 = vpack.c.b16 %v1010, %v1009
      %v1094 = vpack.c.b16 %v1012, %v1011
      %v1095 = vpack.c.b16 %v1014, %v1013
      %v1096 = vpack.c.b16 %v1016, %v1015
      %v1097 = vpack.c.b16 %v1018, %v1017
      %v1098 = vpack.c.b16 %v1020, %v1019
      %v1099 = vpack.c.b16 %v1022, %v1021
      %v1100 = vpack.c.b16 %v1024, %v1023
      %v1101 = vpack.c.b16 %v1026, %v1025
      %v1102 = vpack.c.b16 %v1028, %v1027
      %v1103 = vpack.c.b16 %v1030, %v1029
      %v1104 = vpack.c.b16 %v1032, %v1031
      %1177 = vmatpush.bf16.msra.mxu0 %v1040
      %1178 = vmatpush.bf16.msra.mxu0 %v1039
      %1179 = vmatpush.bf16.msra.mxu0 %v1038
      %1180 = vmatpush.bf16.msra.mxu0 %v1037
      %1181 = vmatpush.bf16.msra.mxu0 %v1036
      %1182 = vmatpush.bf16.msra.mxu0 %v1035
      %1183 = vmatpush.bf16.msra.mxu0 %v1034
      %1184 = vmatpush.bf16.msra.mxu0 %v1033
      %1185 = vmatmul.bf16.gmra.mxu0 %v371
      %v1186 = vpop.f32.mrf.mxu0
      %v1187 = vadd.f32 0.0, %v1186
      %v1188 = vpop.f32.mrf.mxu0
      %v1189 = vadd.f32 0.0, %v1188
      %1190 = vmatmul.bf16.gmra.mxu0 %v372
      %v1191 = vpop.f32.mrf.mxu0
      %v1192 = vadd.f32 0.0, %v1191
      %v1193 = vpop.f32.mrf.mxu0
      %v1194 = vadd.f32 0.0, %v1193
      %1195 = vmatmul.bf16.gmra.mxu0 %v373
      %v1196 = vpop.f32.mrf.mxu0
      %v1197 = vadd.f32 0.0, %v1196
      %v1198 = vpop.f32.mrf.mxu0
      %v1199 = vadd.f32 0.0, %v1198
      %1200 = vmatmul.bf16.gmra.mxu0 %v374
      %v1201 = vpop.f32.mrf.mxu0
      %v1202 = vadd.f32 0.0, %v1201
      %v1203 = vpop.f32.mrf.mxu0
      %v1204 = vadd.f32 0.0, %v1203
      %1205 = vmatmul.bf16.gmra.mxu0 %v375
      %v1206 = vpop.f32.mrf.mxu0
      %v1207 = vadd.f32 0.0, %v1206
      %v1208 = vpop.f32.mrf.mxu0
      %v1209 = vadd.f32 0.0, %v1208
      %1210 = vmatmul.bf16.gmra.mxu0 %v376
      %v1211 = vpop.f32.mrf.mxu0
      %v1212 = vadd.f32 0.0, %v1211
      %v1213 = vpop.f32.mrf.mxu0
      %v1214 = vadd.f32 0.0, %v1213
      %1215 = vmatmul.bf16.gmra.mxu0 %v377
      %v1216 = vpop.f32.mrf.mxu0
      %v1217 = vadd.f32 0.0, %v1216
      %v1218 = vpop.f32.mrf.mxu0
      %v1219 = vadd.f32 0.0, %v1218
      %1220 = vmatmul.bf16.gmra.mxu0 %v378
      %v1221 = vpop.f32.mrf.mxu0
      %v1222 = vadd.f32 0.0, %v1221
      %v1223 = vpop.f32.mrf.mxu0
      %v1224 = vadd.f32 0.0, %v1223
      %1225 = vdwg.mxu0
      %1226 = vmatpush.bf16.msra.mxu0 %v1048
      %1227 = vmatpush.bf16.msra.mxu0 %v1047
      %1228 = vmatpush.bf16.msra.mxu0 %v1046
      %1229 = vmatpush.bf16.msra.mxu0 %v1045
      %1230 = vmatpush.bf16.msra.mxu0 %v1044
      %1231 = vmatpush.bf16.msra.mxu0 %v1043
      %1232 = vmatpush.bf16.msra.mxu0 %v1042
      %1233 = vmatpush.bf16.msra.mxu0 %v1041
      %1234 = vmatmul.bf16.gmra.mxu0 %v423
      %v1235 = vpop.f32.mrf.mxu0
      %v1236 = vadd.f32 %v1187, %v1235
      %v1237 = vpop.f32.mrf.mxu0
      %v1238 = vadd.f32 %v1189, %v1237
      %1239 = vmatmul.bf16.gmra.mxu0 %v435
      %v1240 = vpop.f32.mrf.mxu0
      %v1241 = vadd.f32 %v1192, %v1240
      %v1242 = vpop.f32.mrf.mxu0
      %v1243 = vadd.f32 %v1194, %v1242
      %1244 = vmatmul.bf16.gmra.mxu0 %v447
      %v1245 = vpop.f32.mrf.mxu0
      %v1246 = vadd.f32 %v1197, %v1245
      %v1247 = vpop.f32.mrf.mxu0
      %v1248 = vadd.f32 %v1199, %v1247
      %1249 = vmatmul.bf16.gmra.mxu0 %v459
      %v1250 = vpop.f32.mrf.mxu0
      %v1251 = vadd.f32 %v1202, %v1250
      %v1252 = vpop.f32.mrf.mxu0
      %v1253 = vadd.f32 %v1204, %v1252
      %1254 = vmatmul.bf16.gmra.mxu0 %v471
      %v1255 = vpop.f32.mrf.mxu0
      %v1256 = vadd.f32 %v1207, %v1255
      %v1257 = vpop.f32.mrf.mxu0
      %v1258 = vadd.f32 %v1209, %v1257
      %1259 = vmatmul.bf16.gmra.mxu0 %v483
      %v1260 = vpop.f32.mrf.mxu0
      %v1261 = vadd.f32 %v1212, %v1260
      %v1262 = vpop.f32.mrf.mxu0
      %v1263 = vadd.f32 %v1214, %v1262
      %1264 = vmatmul.bf16.gmra.mxu0 %v495
      %v1265 = vpop.f32.mrf.mxu0
      %v1266 = vadd.f32 %v1217, %v1265
      %v1267 = vpop.f32.mrf.mxu0
      %v1268 = vadd.f32 %v1219, %v1267
      %1269 = vmatmul.bf16.gmra.mxu0 %v507
      %v1270 = vpop.f32.mrf.mxu0
      %v1271 = vadd.f32 %v1222, %v1270
      %v1272 = vpop.f32.mrf.mxu0
      %v1273 = vadd.f32 %v1224, %v1272
      %1274 = vdwg.mxu0
      %1275 = vmatpush.bf16.msra.mxu0 %v1056
      %1276 = vmatpush.bf16.msra.mxu0 %v1055
      %1277 = vmatpush.bf16.msra.mxu0 %v1054
      %1278 = vmatpush.bf16.msra.mxu0 %v1053
      %1279 = vmatpush.bf16.msra.mxu0 %v1052
      %1280 = vmatpush.bf16.msra.mxu0 %v1051
      %1281 = vmatpush.bf16.msra.mxu0 %v1050
      %1282 = vmatpush.bf16.msra.mxu0 %v1049
      %1283 = vmatmul.bf16.gmra.mxu0 %v519
      %v1284 = vpop.f32.mrf.mxu0
      %v1285 = vadd.f32 %v1236, %v1284
      %v1286 = vpop.f32.mrf.mxu0
      %v1287 = vadd.f32 %v1238, %v1286
      %1288 = vmatmul.bf16.gmra.mxu0 %v522
      %v1289 = vpop.f32.mrf.mxu0
      %v1290 = vadd.f32 %v1241, %v1289
      %v1291 = vpop.f32.mrf.mxu0
      %v1292 = vadd.f32 %v1243, %v1291
      %1293 = vmatmul.bf16.gmra.mxu0 %v525
      %v1294 = vpop.f32.mrf.mxu0
      %v1295 = vadd.f32 %v1246, %v1294
      %v1296 = vpop.f32.mrf.mxu0
      %v1297 = vadd.f32 %v1248, %v1296
      %1298 = vmatmul.bf16.gmra.mxu0 %v528
      %v1299 = vpop.f32.mrf.mxu0
      %v1300 = vadd.f32 %v1251, %v1299
      %v1301 = vpop.f32.mrf.mxu0
      %v1302 = vadd.f32 %v1253, %v1301
      %1303 = vmatmul.bf16.gmra.mxu0 %v531
      %v1304 = vpop.f32.mrf.mxu0
      %v1305 = vadd.f32 %v1256, %v1304
      %v1306 = vpop.f32.mrf.mxu0
      %v1307 = vadd.f32 %v1258, %v1306
      %1308 = vmatmul.bf16.gmra.mxu0 %v534
      %v1309 = vpop.f32.mrf.mxu0
      %v1310 = vadd.f32 %v1261, %v1309
      %v1311 = vpop.f32.mrf.mxu0
      %v1312 = vadd.f32 %v1263, %v1311
      %1313 = vmatmul.bf16.gmra.mxu0 %v537
      %v1314 = vpop.f32.mrf.mxu0
      %v1315 = vadd.f32 %v1266, %v1314
      %v1316 = vpop.f32.mrf.mxu0
      %v1317 = vadd.f32 %v1268, %v1316
      %1318 = vmatmul.bf16.gmra.mxu0 %v540
      %v1319 = vpop.f32.mrf.mxu0
      %v1320 = vadd.f32 %v1271, %v1319
      %v1321 = vpop.f32.mrf.mxu0
      %v1322 = vadd.f32 %v1273, %v1321
      %1323 = vdwg.mxu0
      %1324 = vmatpush.bf16.msra.mxu0 %v1064
      %1325 = vmatpush.bf16.msra.mxu0 %v1063
      %1326 = vmatpush.bf16.msra.mxu0 %v1062
      %1327 = vmatpush.bf16.msra.mxu0 %v1061
      %1328 = vmatpush.bf16.msra.mxu0 %v1060
      %1329 = vmatpush.bf16.msra.mxu0 %v1059
      %1330 = vmatpush.bf16.msra.mxu0 %v1058
      %1331 = vmatpush.bf16.msra.mxu0 %v1057
      %1332 = vmatmul.bf16.gmra.mxu0 %v372
      %v1333 = vpop.f32.mrf.mxu0
      %v1334 = vadd.f32 %v1285, %v1333
      %v1335 = vpop.f32.mrf.mxu0
      %v1336 = vadd.f32 %v1287, %v1335
      %1337 = vmatmul.bf16.gmra.mxu0 %v373
      %v1338 = vpop.f32.mrf.mxu0
      %v1339 = vadd.f32 %v1290, %v1338
      %v1340 = vpop.f32.mrf.mxu0
      %v1341 = vadd.f32 %v1292, %v1340
      %1342 = vmatmul.bf16.gmra.mxu0 %v374
      %v1343 = vpop.f32.mrf.mxu0
      %v1344 = vadd.f32 %v1295, %v1343
      %v1345 = vpop.f32.mrf.mxu0
      %v1346 = vadd.f32 %v1297, %v1345
      %1347 = vmatmul.bf16.gmra.mxu0 %v375
      %v1348 = vpop.f32.mrf.mxu0
      %v1349 = vadd.f32 %v1300, %v1348
      %v1350 = vpop.f32.mrf.mxu0
      %v1351 = vadd.f32 %v1302, %v1350
      %1352 = vmatmul.bf16.gmra.mxu0 %v376
      %v1353 = vpop.f32.mrf.mxu0
      %v1354 = vadd.f32 %v1305, %v1353
      %v1355 = vpop.f32.mrf.mxu0
      %v1356 = vadd.f32 %v1307, %v1355
      %1357 = vmatmul.bf16.gmra.mxu0 %v377
      %v1358 = vpop.f32.mrf.mxu0
      %v1359 = vadd.f32 %v1310, %v1358
      %v1360 = vpop.f32.mrf.mxu0
      %v1361 = vadd.f32 %v1312, %v1360
      %1362 = vmatmul.bf16.gmra.mxu0 %v378
      %v1363 = vpop.f32.mrf.mxu0
      %v1364 = vadd.f32 %v1315, %v1363
      %v1365 = vpop.f32.mrf.mxu0
      %v1366 = vadd.f32 %v1317, %v1365
      %1367 = vmatmul.bf16.gmra.mxu0 %v553
      %v1368 = vpop.f32.mrf.mxu0
      %v1369 = vadd.f32 %v1320, %v1368
      %v1370 = vpop.f32.mrf.mxu0
      %v1371 = vadd.f32 %v1322, %v1370
      %1372 = vdwg.mxu0
      %1373 = vmatpush.bf16.msra.mxu0 %v1072
      %1374 = vmatpush.bf16.msra.mxu0 %v1071
      %1375 = vmatpush.bf16.msra.mxu0 %v1070
      %1376 = vmatpush.bf16.msra.mxu0 %v1069
      %1377 = vmatpush.bf16.msra.mxu0 %v1068
      %1378 = vmatpush.bf16.msra.mxu0 %v1067
      %1379 = vmatpush.bf16.msra.mxu0 %v1066
      %1380 = vmatpush.bf16.msra.mxu0 %v1065
      %1381 = vmatmul.bf16.gmra.mxu0 %v435
      %v1382 = vpop.f32.mrf.mxu0
      %v1383 = vadd.f32 %v1334, %v1382
      %v1384 = vpop.f32.mrf.mxu0
      %v1385 = vadd.f32 %v1336, %v1384
      %1386 = vmatmul.bf16.gmra.mxu0 %v447
      %v1387 = vpop.f32.mrf.mxu0
      %v1388 = vadd.f32 %v1339, %v1387
      %v1389 = vpop.f32.mrf.mxu0
      %v1390 = vadd.f32 %v1341, %v1389
      %1391 = vmatmul.bf16.gmra.mxu0 %v459
      %v1392 = vpop.f32.mrf.mxu0
      %v1393 = vadd.f32 %v1344, %v1392
      %v1394 = vpop.f32.mrf.mxu0
      %v1395 = vadd.f32 %v1346, %v1394
      %1396 = vmatmul.bf16.gmra.mxu0 %v471
      %v1397 = vpop.f32.mrf.mxu0
      %v1398 = vadd.f32 %v1349, %v1397
      %v1399 = vpop.f32.mrf.mxu0
      %v1400 = vadd.f32 %v1351, %v1399
      %1401 = vmatmul.bf16.gmra.mxu0 %v483
      %v1402 = vpop.f32.mrf.mxu0
      %v1403 = vadd.f32 %v1354, %v1402
      %v1404 = vpop.f32.mrf.mxu0
      %v1405 = vadd.f32 %v1356, %v1404
      %1406 = vmatmul.bf16.gmra.mxu0 %v495
      %v1407 = vpop.f32.mrf.mxu0
      %v1408 = vadd.f32 %v1359, %v1407
      %v1409 = vpop.f32.mrf.mxu0
      %v1410 = vadd.f32 %v1361, %v1409
      %1411 = vmatmul.bf16.gmra.mxu0 %v507
      %v1412 = vpop.f32.mrf.mxu0
      %v1413 = vadd.f32 %v1364, %v1412
      %v1414 = vpop.f32.mrf.mxu0
      %v1415 = vadd.f32 %v1366, %v1414
      %1416 = vmatmul.bf16.gmra.mxu0 %v569
      %v1417 = vpop.f32.mrf.mxu0
      %v1418 = vadd.f32 %v1369, %v1417
      %v1419 = vpop.f32.mrf.mxu0
      %v1420 = vadd.f32 %v1371, %v1419
      %1421 = vdwg.mxu0
      %1422 = vmatpush.bf16.msra.mxu0 %v1080
      %1423 = vmatpush.bf16.msra.mxu0 %v1079
      %1424 = vmatpush.bf16.msra.mxu0 %v1078
      %1425 = vmatpush.bf16.msra.mxu0 %v1077
      %1426 = vmatpush.bf16.msra.mxu0 %v1076
      %1427 = vmatpush.bf16.msra.mxu0 %v1075
      %1428 = vmatpush.bf16.msra.mxu0 %v1074
      %1429 = vmatpush.bf16.msra.mxu0 %v1073
      %1430 = vmatmul.bf16.gmra.mxu0 %v522
      %v1431 = vpop.f32.mrf.mxu0
      %v1432 = vadd.f32 %v1383, %v1431
      %v1433 = vpop.f32.mrf.mxu0
      %v1434 = vadd.f32 %v1385, %v1433
      %1435 = vmatmul.bf16.gmra.mxu0 %v525
      %v1436 = vpop.f32.mrf.mxu0
      %v1437 = vadd.f32 %v1388, %v1436
      %v1438 = vpop.f32.mrf.mxu0
      %v1439 = vadd.f32 %v1390, %v1438
      %1440 = vmatmul.bf16.gmra.mxu0 %v528
      %v1441 = vpop.f32.mrf.mxu0
      %v1442 = vadd.f32 %v1393, %v1441
      %v1443 = vpop.f32.mrf.mxu0
      %v1444 = vadd.f32 %v1395, %v1443
      %1445 = vmatmul.bf16.gmra.mxu0 %v531
      %v1446 = vpop.f32.mrf.mxu0
      %v1447 = vadd.f32 %v1398, %v1446
      %v1448 = vpop.f32.mrf.mxu0
      %v1449 = vadd.f32 %v1400, %v1448
      %1450 = vmatmul.bf16.gmra.mxu0 %v534
      %v1451 = vpop.f32.mrf.mxu0
      %v1452 = vadd.f32 %v1403, %v1451
      %v1453 = vpop.f32.mrf.mxu0
      %v1454 = vadd.f32 %v1405, %v1453
      %1455 = vmatmul.bf16.gmra.mxu0 %v537
      %v1456 = vpop.f32.mrf.mxu0
      %v1457 = vadd.f32 %v1408, %v1456
      %v1458 = vpop.f32.mrf.mxu0
      %v1459 = vadd.f32 %v1410, %v1458
      %1460 = vmatmul.bf16.gmra.mxu0 %v540
      %v1461 = vpop.f32.mrf.mxu0
      %v1462 = vadd.f32 %v1413, %v1461
      %v1463 = vpop.f32.mrf.mxu0
      %v1464 = vadd.f32 %v1415, %v1463
      %1465 = vmatmul.bf16.gmra.mxu0 %v573
      %v1466 = vpop.f32.mrf.mxu0
      %v1467 = vadd.f32 %v1418, %v1466
      %v1468 = vpop.f32.mrf.mxu0
      %v1469 = vadd.f32 %v1420, %v1468
      %1470 = vdwg.mxu0
      %1471 = vmatpush.bf16.msra.mxu0 %v1088
      %1472 = vmatpush.bf16.msra.mxu0 %v1087
      %1473 = vmatpush.bf16.msra.mxu0 %v1086
      %1474 = vmatpush.bf16.msra.mxu0 %v1085
      %1475 = vmatpush.bf16.msra.mxu0 %v1084
      %1476 = vmatpush.bf16.msra.mxu0 %v1083
      %1477 = vmatpush.bf16.msra.mxu0 %v1082
      %1478 = vmatpush.bf16.msra.mxu0 %v1081
      %1479 = vmatmul.bf16.gmra.mxu0 %v373
      %v1480 = vpop.f32.mrf.mxu0
      %v1481 = vadd.f32 %v1432, %v1480
      %v1482 = vpop.f32.mrf.mxu0
      %v1483 = vadd.f32 %v1434, %v1482
      %1484 = vmatmul.bf16.gmra.mxu0 %v374
      %v1485 = vpop.f32.mrf.mxu0
      %v1486 = vadd.f32 %v1437, %v1485
      %v1487 = vpop.f32.mrf.mxu0
      %v1488 = vadd.f32 %v1439, %v1487
      %1489 = vmatmul.bf16.gmra.mxu0 %v375
      %v1490 = vpop.f32.mrf.mxu0
      %v1491 = vadd.f32 %v1442, %v1490
      %v1492 = vpop.f32.mrf.mxu0
      %v1493 = vadd.f32 %v1444, %v1492
      %1494 = vmatmul.bf16.gmra.mxu0 %v376
      %v1495 = vpop.f32.mrf.mxu0
      %v1496 = vadd.f32 %v1447, %v1495
      %v1497 = vpop.f32.mrf.mxu0
      %v1498 = vadd.f32 %v1449, %v1497
      %1499 = vmatmul.bf16.gmra.mxu0 %v377
      %v1500 = vpop.f32.mrf.mxu0
      %v1501 = vadd.f32 %v1452, %v1500
      %v1502 = vpop.f32.mrf.mxu0
      %v1503 = vadd.f32 %v1454, %v1502
      %1504 = vmatmul.bf16.gmra.mxu0 %v378
      %v1505 = vpop.f32.mrf.mxu0
      %v1506 = vadd.f32 %v1457, %v1505
      %v1507 = vpop.f32.mrf.mxu0
      %v1508 = vadd.f32 %v1459, %v1507
      %1509 = vmatmul.bf16.gmra.mxu0 %v553
      %v1510 = vpop.f32.mrf.mxu0
      %v1511 = vadd.f32 %v1462, %v1510
      %v1512 = vpop.f32.mrf.mxu0
      %v1513 = vadd.f32 %v1464, %v1512
      %1514 = vmatmul.bf16.gmra.mxu0 %v579
      %v1515 = vpop.f32.mrf.mxu0
      %v1516 = vadd.f32 %v1467, %v1515
      %v1517 = vpop.f32.mrf.mxu0
      %v1518 = vadd.f32 %v1469, %v1517
      %1519 = vdwg.mxu0
      %1520 = vmatpush.bf16.msra.mxu0 %v1096
      %1521 = vmatpush.bf16.msra.mxu0 %v1095
      %1522 = vmatpush.bf16.msra.mxu0 %v1094
      %1523 = vmatpush.bf16.msra.mxu0 %v1093
      %1524 = vmatpush.bf16.msra.mxu0 %v1092
      %1525 = vmatpush.bf16.msra.mxu0 %v1091
      %1526 = vmatpush.bf16.msra.mxu0 %v1090
      %1527 = vmatpush.bf16.msra.mxu0 %v1089
      %1528 = vmatmul.bf16.gmra.mxu0 %v447
      %v1529 = vpop.f32.mrf.mxu0
      %v1530 = vadd.f32 %v1481, %v1529
      %v1531 = vpop.f32.mrf.mxu0
      %v1532 = vadd.f32 %v1483, %v1531
      %1533 = vmatmul.bf16.gmra.mxu0 %v459
      %v1534 = vpop.f32.mrf.mxu0
      %v1535 = vadd.f32 %v1486, %v1534
      %v1536 = vpop.f32.mrf.mxu0
      %v1537 = vadd.f32 %v1488, %v1536
      %1538 = vmatmul.bf16.gmra.mxu0 %v471
      %v1539 = vpop.f32.mrf.mxu0
      %v1540 = vadd.f32 %v1491, %v1539
      %v1541 = vpop.f32.mrf.mxu0
      %v1542 = vadd.f32 %v1493, %v1541
      %1543 = vmatmul.bf16.gmra.mxu0 %v483
      %v1544 = vpop.f32.mrf.mxu0
      %v1545 = vadd.f32 %v1496, %v1544
      %v1546 = vpop.f32.mrf.mxu0
      %v1547 = vadd.f32 %v1498, %v1546
      %1548 = vmatmul.bf16.gmra.mxu0 %v495
      %v1549 = vpop.f32.mrf.mxu0
      %v1550 = vadd.f32 %v1501, %v1549
      %v1551 = vpop.f32.mrf.mxu0
      %v1552 = vadd.f32 %v1503, %v1551
      %1553 = vmatmul.bf16.gmra.mxu0 %v507
      %v1554 = vpop.f32.mrf.mxu0
      %v1555 = vadd.f32 %v1506, %v1554
      %v1556 = vpop.f32.mrf.mxu0
      %v1557 = vadd.f32 %v1508, %v1556
      %1558 = vmatmul.bf16.gmra.mxu0 %v569
      %v1559 = vpop.f32.mrf.mxu0
      %v1560 = vadd.f32 %v1511, %v1559
      %v1561 = vpop.f32.mrf.mxu0
      %v1562 = vadd.f32 %v1513, %v1561
      %1563 = vmatmul.bf16.gmra.mxu0 %v595
      %v1564 = vpop.f32.mrf.mxu0
      %v1565 = vadd.f32 %v1516, %v1564
      %v1566 = vpop.f32.mrf.mxu0
      %v1567 = vadd.f32 %v1518, %v1566
      %1568 = vdwg.mxu0
      %1569 = vmatpush.bf16.msra.mxu0 %v1104
      %1570 = vmatpush.bf16.msra.mxu0 %v1103
      %1571 = vmatpush.bf16.msra.mxu0 %v1102
      %1572 = vmatpush.bf16.msra.mxu0 %v1101
      %1573 = vmatpush.bf16.msra.mxu0 %v1100
      %1574 = vmatpush.bf16.msra.mxu0 %v1099
      %1575 = vmatpush.bf16.msra.mxu0 %v1098
      %1576 = vmatpush.bf16.msra.mxu0 %v1097
      %1577 = vmatmul.bf16.gmra.mxu0 %v525
      %v1578 = vpop.f32.mrf.mxu0
      %v1579 = vadd.f32 %v1530, %v1578
      %v1580 = vpop.f32.mrf.mxu0
      %v1581 = vadd.f32 %v1532, %v1580
      %1582 = vmatmul.bf16.gmra.mxu0 %v528
      %v1583 = vpop.f32.mrf.mxu0
      %v1584 = vadd.f32 %v1535, %v1583
      %v1585 = vpop.f32.mrf.mxu0
      %v1586 = vadd.f32 %v1537, %v1585
      %1587 = vmatmul.bf16.gmra.mxu0 %v531
      %v1588 = vpop.f32.mrf.mxu0
      %v1589 = vadd.f32 %v1540, %v1588
      %v1590 = vpop.f32.mrf.mxu0
      %v1591 = vadd.f32 %v1542, %v1590
      %1592 = vmatmul.bf16.gmra.mxu0 %v534
      %v1593 = vpop.f32.mrf.mxu0
      %v1594 = vadd.f32 %v1545, %v1593
      %v1595 = vpop.f32.mrf.mxu0
      %v1596 = vadd.f32 %v1547, %v1595
      %1597 = vmatmul.bf16.gmra.mxu0 %v537
      %v1598 = vpop.f32.mrf.mxu0
      %v1599 = vadd.f32 %v1550, %v1598
      %v1600 = vpop.f32.mrf.mxu0
      %v1601 = vadd.f32 %v1552, %v1600
      %1602 = vmatmul.bf16.gmra.mxu0 %v540
      %v1603 = vpop.f32.mrf.mxu0
      %v1604 = vadd.f32 %v1555, %v1603
      %v1605 = vpop.f32.mrf.mxu0
      %v1606 = vadd.f32 %v1557, %v1605
      %1607 = vmatmul.bf16.gmra.mxu0 %v573
      %v1608 = vpop.f32.mrf.mxu0
      %v1609 = vadd.f32 %v1560, %v1608
      %v1610 = vpop.f32.mrf.mxu0
      %v1611 = vadd.f32 %v1562, %v1610
      %1612 = vmatmul.bf16.gmra.mxu0 %v599
      %v1613 = vpop.f32.mrf.mxu0
      %v1614 = vadd.f32 %v1565, %v1613
      %v1615 = vpop.f32.mrf.mxu0
      %v1616 = vadd.f32 %v1567, %v1615
      %1617 = vdwg.mxu0
      %1618 = vst [vmem:[%s299] sm:$0xff] %v1579
      %1619 = vst [vmem:[%s299 + $0x8] sm:$0xff] %v1581
      %1620 = vst [vmem:[%s299 + $0x10] sm:$0xff] %v1584
      %1621 = vst [vmem:[%s299 + $0x18] sm:$0xff] %v1586
      %1622 = vst [vmem:[%s299 + $0x20] sm:$0xff] %v1589
      %1623 = vst [vmem:[%s299 + $0x28] sm:$0xff] %v1591
      %1624 = vst [vmem:[%s299 + $0x30] sm:$0xff] %v1594
      %1625 = vst [vmem:[%s299 + $0x38] sm:$0xff] %v1596
      %1626 = vst [vmem:[%s299 + $0x40] sm:$0xff] %v1599
      %1627 = vst [vmem:[%s299 + $0x48] sm:$0xff] %v1601
      %1628 = vst [vmem:[%s299 + $0x50] sm:$0xff] %v1604
      %1629 = vst [vmem:[%s299 + $0x58] sm:$0xff] %v1606
      %1630 = vst [vmem:[%s299 + $0x60] sm:$0xff] %v1609
      %1631 = vst [vmem:[%s299 + $0x68] sm:$0xff] %v1611
      %1632 = vst [vmem:[%s299 + $0x70] sm:$0xff] %v1614
      %1633 = vst [vmem:[%s299 + $0x78] sm:$0xff] %v1616
      %v1634 = vadd.f32 %v1579, %v1581
      %v1635 = vadd.f32 %v1634, %v1584
      %v1636 = vadd.f32 %v1635, %v1586
      %v1637 = vadd.f32 %v1636, %v1589
      %v1638 = vadd.f32 %v1637, %v1591
      %v1639 = vadd.f32 %v1638, %v1594
      %v1640 = vadd.f32 %v1639, %v1596
      %v1641 = vadd.f32 %v1640, %v1599
      %v1642 = vadd.f32 %v1641, %v1601
      %v1643 = vadd.f32 %v1642, %v1604
      %v1644 = vadd.f32 %v1643, %v1606
      %v1645 = vadd.f32 %v1644, %v1609
      %v1646 = vadd.f32 %v1645, %v1611
      %v1647 = vadd.f32 %v1646, %v1614
      %v1648 = vadd.f32 %v1647, %v1616
      %v1649 = vrot.slane %v1648, 4
      %v1650 = vadd.f32 %v1648, %v1649
      %v1651 = vrot.slane %v1650, 2
      %v1652 = vadd.f32 %v1650, %v1651
      %v1653 = vrot.slane %v1652, 1
      %v1654 = vadd.f32 %v1652, %v1653
      %v1655 = vmul.f32 %v1579, %v1579
      %v1656 = vmul.f32 %v1581, %v1581
      %v1657 = vmul.f32 %v1584, %v1584
      %v1658 = vmul.f32 %v1586, %v1586
      %v1659 = vmul.f32 %v1589, %v1589
      %v1660 = vmul.f32 %v1591, %v1591
      %v1661 = vmul.f32 %v1594, %v1594
      %v1662 = vmul.f32 %v1596, %v1596
      %v1663 = vmul.f32 %v1599, %v1599
      %v1664 = vmul.f32 %v1601, %v1601
      %v1665 = vmul.f32 %v1604, %v1604
      %v1666 = vmul.f32 %v1606, %v1606
      %v1667 = vmul.f32 %v1609, %v1609
      %v1668 = vmul.f32 %v1611, %v1611
      %v1669 = vmul.f32 %v1614, %v1614
      %v1670 = vmul.f32 %v1616, %v1616
      %v1671 = vadd.f32 %v1655, %v1656
      %v1672 = vadd.f32 %v1671, %v1657
      %v1673 = vadd.f32 %v1672, %v1658
      %v1674 = vadd.f32 %v1673, %v1659
      %v1675 = vadd.f32 %v1674, %v1660
      %v1676 = vadd.f32 %v1675, %v1661
      %v1677 = vadd.f32 %v1676, %v1662
      %v1678 = vadd.f32 %v1677, %v1663
      %v1679 = vadd.f32 %v1678, %v1664
      %v1680 = vadd.f32 %v1679, %v1665
      %v1681 = vadd.f32 %v1680, %v1666
      %v1682 = vadd.f32 %v1681, %v1667
      %v1683 = vadd.f32 %v1682, %v1668
      %v1684 = vadd.f32 %v1683, %v1669
      %v1685 = vadd.f32 %v1684, %v1670
      %v1686 = vrot.slane %v1685, 4
      %v1687 = vadd.f32 %v1685, %v1686
      %v1688 = vrot.slane %v1687, 2
      %v1689 = vadd.f32 %v1687, %v1688
      %v1690 = vrot.slane %v1689, 1
      %v1691 = vadd.f32 %v1689, %v1690
      %vm1692 = vcmask 1040384
      %v1693 = vsel %vm1692, %v1654, %v1691
      %vm1694 = vcmask 1041408
      %v1695 = vsel %vm1694, %v1693, 0.0
      %1696 = vst [vmem:[%s308] sm:$0xff] %v1695
      %s1697 = smul.u32 8, %s21
      %p1698 = scmp.lt.s32.totalorder %s20, 1
      %s1699 = scalar_select %p1698, %s20, 1
      %p1700 = scmp.lt.s32.totalorder %s1697, 15
      %s1701 = scalar_select %p1700, %s1697, 15
      %s1702 = smul.addr %s1701, 2
      %s1703 = smul.addr %s1699, 32
      %s1704 = sadd.s32 %s1702, %s1703
      %s1705 = smul.addr %s1704, 8
      %s1706 = scalar_lea.vmem %s3, %s1705
      %p1707 = scmp.lt.s32.totalorder %s20, 1
      %s1708 = scalar_select %p1707, %s20, 1
      %p1709 = scmp.lt.s32.totalorder %s21, 1
      %s1710 = scalar_select %p1709, %s21, 1
      %s1711 = smul.addr %s1708, 2
      %s1712 = sadd.s32 %s1710, %s1711
      %s1713 = smul.addr %s1712, 8
      %s1714 = scalar_lea.vmem %s4, %s1713
      // Predicated region
      $region33: #{up_forward.4} parent=31 // pred_check
        %p1715 = pneg %p127
      $region34: #{up_forward.4} parent=31 // pred_check_branch
        %1717 = sbr.rel (%p1715) target = $region36
      $region35: #{up_forward.4} parent=31 // pred_region
        %s1718 = smul.u32 8, %s21
      $region36: #{up_forward.4} parent=31 // pred_fallthru
        _
      // Predicated region
      $region37: #{up_forward.4} parent=31 // pred_check
        %p1719 = pneg %p155
      $region38: #{up_forward.4} parent=31 // pred_check_branch
        %1721 = sbr.rel (%p1719) target = $region40
      $region39: #{up_forward.4} parent=31 // pred_region
        _
      $region40: #{up_forward.4} parent=31 // pred_fallthru
        _
    $region32: #{up_forward.4} parent=5 // pred_fallthru
      _
    %p1722 = scmp.le.s32.totalorder 2, %s11
    // Predicated region
    $region41: #{up_forward.4} parent=5 // pred_check
      %p1723 = pneg %p1722
    $region42: #{up_forward.4} parent=5 // pred_check_branch
      %1725 = sbr.rel (%p1723) target = $region44
    $region43: #{up_forward.4} parent=5 // pred_region
      %s1726 = ssub.s32 %s11, 2
      // Predicated region
      $region45: #{up_forward.4} parent=43 // pred_check
        %p1727 = pneg %p133
      $region46: #{up_forward.4} parent=43 // pred_check_branch
        %1729 = sbr.rel (%p1727) target = $region48
      $region47: #{up_forward.4} parent=43 // pred_region
        %s1730 = smul.u32 8, %s23
        %p1731 = scmp.lt.s32.totalorder %s22, 1
        %s1732 = scalar_select %p1731, %s22, 1
        %p1733 = scmp.lt.s32.totalorder %s1730, 15
        %s1734 = scalar_select %p1733, %s1730, 15
        %s1735 = smul.addr %s1734, 2
        %s1736 = smul.addr %s1732, 32
        %s1737 = sadd.s32 %s1735, %s1736
        %s1738 = smul.addr %s1737, 8
        %s1739 = scalar_lea.vmem %s3, %s1738
      $region48: #{up_forward.4} parent=43 // pred_fallthru
        _
      // Predicated region
      $region49: #{up_forward.4} parent=43 // pred_check
        %p1740 = pneg %p161
      $region50: #{up_forward.4} parent=43 // pred_check_branch
        %1742 = sbr.rel (%p1740) target = $region52
      $region51: #{up_forward.4} parent=43 // pred_region
        %p1743 = scmp.lt.s32.totalorder %s22, 1
        %s1744 = scalar_select %p1743, %s22, 1
        %p1745 = scmp.lt.s32.totalorder %s23, 1
        %s1746 = scalar_select %p1745, %s23, 1
        %s1747 = smul.addr %s1744, 2
        %s1748 = sadd.s32 %s1746, %s1747
        %s1749 = smul.addr %s1748, 8
        %s1750 = scalar_lea.vmem %s4, %s1749
      $region52: #{up_forward.4} parent=43 // pred_fallthru
        _
    $region44: #{up_forward.4} parent=5 // pred_fallthru
      _
  $region6: #{up_forward.4} parent=0 // loop_footer
    %s15 = sadd.s32 1, %s11
  $region7: #{up_forward.4} parent=0 // loop_footer_branch
    %10 = sbr.rel target = $region3
  $region8: #{up_forward.4} parent=0 // loop_exit
    _

</llo_original>
